<compile_context>
chip_gen: v7x
topology: tpu7x:2x2x1
jax: 0.10.0
libtpu: 0.0.40
codegen_flags: <defaults>
</compile_context>

<pallas_src>
import jax
import jax.numpy as jnp
from jax.experimental import pallas as pl
from jax.experimental.pallas import tpu as pltpu

IN_FEATURES = 32 * 32 * 3   # 3072
H1 = 64
H2 = 32
OUT = 10

TB_MAX = 1024               # max batch-tile rows (fits all of v5e/v6e/v7x in bf16)


def _round_up(x, m):
    return ((x + m - 1) // m) * m


def mlp_kernel(x_ref, w1_ref, b1_ref, w2_ref, b2_ref, w3_ref, b3_ref, o_ref):
    # x tile: (TB, 3072) bf16; weights bf16 (VMEM-resident); biases f32.
    # Layer 1: (TB, 3072) @ (3072, 64) + (1, 64) -> ReLU
    h1 = jnp.dot(x_ref[...], w1_ref[...], preferred_element_type=jnp.float32) + b1_ref[...]
    h1 = jnp.maximum(h1, 0.0).astype(jnp.bfloat16)

    # Layer 2: (TB, 64) @ (64, 32) + (1, 32) -> ReLU
    h2 = jnp.dot(h1, w2_ref[...], preferred_element_type=jnp.float32) + b2_ref[...]
    h2 = jnp.maximum(h2, 0.0).astype(jnp.bfloat16)

    # Layer 3: (TB, 32) @ (32, 10) + (1, 10)
    o_ref[...] = (
        jnp.dot(h2, w3_ref[...], preferred_element_type=jnp.float32) + b3_ref[...]
    ).astype(o_ref.dtype)


@jax.jit
def mlp_forward(x_nchw, w1, b1, w2, b2, w3, b3):
    # Glue: flatten NCHW -> (B, C*H*W), matching nn.Flatten semantics.
    B = x_nchw.shape[0]
    x = x_nchw.reshape(B, -1).astype(jnp.bfloat16)

    # Pick a batch tile: multiple of 16 (bf16 sublane packing), capped at TB_MAX,
    # and pad the batch so TB divides it exactly.
    B_pad = _round_up(B, 16)
    TB = min(TB_MAX, B_pad)
    B_pad = _round_up(B_pad, TB)
    if B_pad != B:
        x = jnp.pad(x, ((0, B_pad - B), (0, 0)))

    # bf16 weights halve the (one-time) weight stream; f32 biases added post-dot.
    w1b = w1.astype(jnp.bfloat16)
    w2b = w2.astype(jnp.bfloat16)
    w3b = w3.astype(jnp.bfloat16)

    num_tiles = B_pad // TB

    flops = 2 * B_pad * (IN_FEATURES * H1 + H1 * H2 + H2 * OUT)
    bytes_accessed = (
        B_pad * IN_FEATURES * 2                       # bf16 x read
        + (IN_FEATURES * H1 + H1 * H2 + H2 * OUT) * 2  # bf16 weights
        + (H1 + H2 + OUT) * 4                          # f32 biases
        + B_pad * OUT * 4                              # f32 output write
    )

    out = pl.pallas_call(
        mlp_kernel,
        out_shape=jax.ShapeDtypeStruct((B_pad, OUT), jnp.float32),
        grid_spec=pltpu.PrefetchScalarGridSpec(
            num_scalar_prefetch=0,
            grid=(num_tiles,),
            in_specs=[
                # Activation tile marches over the batch (double-buffered).
                pl.BlockSpec((TB, IN_FEATURES), lambda i: (i, 0)),
                # Weights/biases: constant index_maps -> stay resident in VMEM.
                pl.BlockSpec((IN_FEATURES, H1), lambda i: (0, 0)),
                pl.BlockSpec((1, H1), lambda i: (0, 0)),
                pl.BlockSpec((H1, H2), lambda i: (0, 0)),
                pl.BlockSpec((1, H2), lambda i: (0, 0)),
                pl.BlockSpec((H2, OUT), lambda i: (0, 0)),
                pl.BlockSpec((1, OUT), lambda i: (0, 0)),
            ],
            out_specs=pl.BlockSpec((TB, OUT), lambda i: (i, 0)),
        ),
        compiler_params=pltpu.CompilerParams(
            # Batch rows are independent -> parallel (v7x shards across both TCs).
            dimension_semantics=("parallel",),
            vmem_limit_bytes=32 * 1024 * 1024,
        ),
        cost_estimate=pl.CostEstimate(
            flops=flops, transcendentals=0, bytes_accessed=bytes_accessed
        ),
    )(x, w1b, b1, w2b, b2, w3b, b3)
    return out[:B]


def init_params(key):
    """Deterministic init mimicking PyTorch's default Linear init:
    uniform(-1/sqrt(fan_in), 1/sqrt(fan_in)) for both weights and biases."""
    keys = jax.random.split(key, 6)

    def linear_init(kw, kb, fan_in, fan_out):
        bound = 1.0 / (fan_in ** 0.5)
        w = jax.random.uniform(kw, (fan_in, fan_out), jnp.float32, -bound, bound)
        b = jax.random.uniform(kb, (1, fan_out), jnp.float32, -bound, bound)
        return w, b

    w1, b1 = linear_init(keys[0], keys[1], IN_FEATURES, H1)
    w2, b2 = linear_init(keys[2], keys[3], H1, H2)
    w3, b3 = linear_init(keys[4], keys[5], H2, OUT)
    return w1, b1, w2, b2, w3, b3


if __name__ == "__main__":
    key = jax.random.PRNGKey(0)
    k_x, k_p = jax.random.split(key)

    # Small batch of CIFAR-like NCHW images: (2, 3, 32, 32)
    x = jax.random.normal(k_x, (2, 3, 32, 32), dtype=jnp.float32)
    params = init_params(k_p)

    out = mlp_forward(x, *params)
    out = jax.block_until_ready(out)
    assert out.shape == (2, 10)

    w1, b1, w2, b2, w3, b3 = params
    xf = x.reshape(x.shape[0], -1)

    # Reference 1: mirror of the kernel's bf16-input / f32-accumulate math.
    xb = xf.astype(jnp.bfloat16)
    w1b, w2b, w3b = (w.astype(jnp.bfloat16) for w in (w1, w2, w3))
    r = jnp.maximum(jnp.dot(xb, w1b, preferred_element_type=jnp.float32) + b1, 0.0)
    r = jnp.maximum(
        jnp.dot(r.astype(jnp.bfloat16), w2b, preferred_element_type=jnp.float32) + b2, 0.0
    )
    ref_bf16 = jnp.dot(r.astype(jnp.bfloat16), w3b, preferred_element_type=jnp.float32) + b3
    assert jnp.allclose(out, ref_bf16, atol=5e-3, rtol=5e-3)

    # Reference 2: pure f32 PyTorch-semantics forward (loose tol for bf16 inputs).
    ref = jnp.maximum(xf @ w1 + b1, 0.0)
    ref = jnp.maximum(ref @ w2 + b2, 0.0)
    ref = ref @ w3 + b3
    assert jnp.allclose(out, ref, atol=1e-1, rtol=1e-1)

    print("KERNEL_OK")
</pallas_src>

<mosaic_0001>
module attributes {stable_mosaic.version = 11 : i64} {
  func.func @mlp_kernel(%arg0: i32, %arg1: memref<16x3072xbf16, #tpu.memory_space<vmem>>, %arg2: memref<3072x64xbf16, #tpu.memory_space<vmem>>, %arg3: memref<1x64xf32, #tpu.memory_space<vmem>>, %arg4: memref<64x32xbf16, #tpu.memory_space<vmem>>, %arg5: memref<1x32xf32, #tpu.memory_space<vmem>>, %arg6: memref<32x10xbf16, #tpu.memory_space<vmem>>, %arg7: memref<1x10xf32, #tpu.memory_space<vmem>>, %arg8: memref<16x10xf32, #tpu.memory_space<vmem>>) attributes {dimension_semantics = [#tpu.dimension_semantics<parallel>], iteration_bounds = array<i64: 1>, scalar_prefetch = 0 : i64, scratch_operands = 0 : i64, tpu.core_type = #tpu.core_type<tc>, window_params = [{transform_indices = @transform_0, window_bounds = array<i64: 16, 3072>}, {pipeline_mode = #tpu.pipeline_mode<synchronous>, transform_indices = @transform_1, window_bounds = array<i64: 3072, 64>}, {pipeline_mode = #tpu.pipeline_mode<synchronous>, transform_indices = @transform_2, window_bounds = array<i64: 1, 64>}, {pipeline_mode = #tpu.pipeline_mode<synchronous>, transform_indices = @transform_3, window_bounds = array<i64: 64, 32>}, {pipeline_mode = #tpu.pipeline_mode<synchronous>, transform_indices = @transform_4, window_bounds = array<i64: 1, 32>}, {pipeline_mode = #tpu.pipeline_mode<synchronous>, transform_indices = @transform_5, window_bounds = array<i64: 32, 10>}, {pipeline_mode = #tpu.pipeline_mode<synchronous>, transform_indices = @transform_6, window_bounds = array<i64: 1, 10>}, {transform_indices = @transform_7, window_bounds = array<i64: 16, 10>}]} {
    %c0 = arith.constant 0 : index
    %c0_0 = arith.constant 0 : index
    %0 = vector.load %arg1[%c0, %c0_0] : memref<16x3072xbf16, #tpu.memory_space<vmem>>, vector<16x3072xbf16>
    %c0_1 = arith.constant 0 : index
    %c0_2 = arith.constant 0 : index
    %1 = vector.load %arg2[%c0_1, %c0_2] : memref<3072x64xbf16, #tpu.memory_space<vmem>>, vector<3072x64xbf16>
    %cst = arith.constant dense<0.000000e+00> : vector<16x64xf32>
    %2 = tpu.matmul %0, %1, %cst {dimension_numbers = #tpu.dot_dimension_numbers<[1], [0], [0], [1], [0, 0, 1, 1], [], []>} : vector<16x3072xbf16>, vector<3072x64xbf16>, vector<16x64xf32> -> vector<16x64xf32>
    %c0_3 = arith.constant 0 : index
    %c0_4 = arith.constant 0 : index
    %3 = vector.load %arg3[%c0_3, %c0_4] : memref<1x64xf32, #tpu.memory_space<vmem>>, vector<1x64xf32>
    %4 = vector.broadcast %3 : vector<1x64xf32> to vector<16x64xf32>
    %5 = arith.addf %2, %4 : vector<16x64xf32>
    %cst_5 = arith.constant 0.000000e+00 : f32
    %6 = vector.broadcast %cst_5 : f32 to vector<16x64xf32>
    %7 = arith.maximumf %5, %6 : vector<16x64xf32>
    %8 = arith.truncf %7 : vector<16x64xf32> to vector<16x64xbf16>
    %c0_6 = arith.constant 0 : index
    %c0_7 = arith.constant 0 : index
    %9 = vector.load %arg4[%c0_6, %c0_7] : memref<64x32xbf16, #tpu.memory_space<vmem>>, vector<64x32xbf16>
    %cst_8 = arith.constant dense<0.000000e+00> : vector<16x32xf32>
    %10 = tpu.matmul %8, %9, %cst_8 {dimension_numbers = #tpu.dot_dimension_numbers<[1], [0], [0], [1], [0, 0, 1, 1], [], []>} : vector<16x64xbf16>, vector<64x32xbf16>, vector<16x32xf32> -> vector<16x32xf32>
    %c0_9 = arith.constant 0 : index
    %c0_10 = arith.constant 0 : index
    %11 = vector.load %arg5[%c0_9, %c0_10] : memref<1x32xf32, #tpu.memory_space<vmem>>, vector<1x32xf32>
    %12 = vector.broadcast %11 : vector<1x32xf32> to vector<16x32xf32>
    %13 = arith.addf %10, %12 : vector<16x32xf32>
    %cst_11 = arith.constant 0.000000e+00 : f32
    %14 = vector.broadcast %cst_11 : f32 to vector<16x32xf32>
    %15 = arith.maximumf %13, %14 : vector<16x32xf32>
    %16 = arith.truncf %15 : vector<16x32xf32> to vector<16x32xbf16>
    %c0_12 = arith.constant 0 : index
    %c0_13 = arith.constant 0 : index
    %17 = vector.load %arg6[%c0_12, %c0_13] : memref<32x10xbf16, #tpu.memory_space<vmem>>, vector<32x10xbf16>
    %cst_14 = arith.constant dense<0.000000e+00> : vector<16x10xf32>
    %18 = tpu.matmul %16, %17, %cst_14 {dimension_numbers = #tpu.dot_dimension_numbers<[1], [0], [0], [1], [0, 0, 1, 1], [], []>} : vector<16x32xbf16>, vector<32x10xbf16>, vector<16x10xf32> -> vector<16x10xf32>
    %c0_15 = arith.constant 0 : index
    %c0_16 = arith.constant 0 : index
    %19 = vector.load %arg7[%c0_15, %c0_16] : memref<1x10xf32, #tpu.memory_space<vmem>>, vector<1x10xf32>
    %20 = vector.broadcast %19 : vector<1x10xf32> to vector<16x10xf32>
    %21 = arith.addf %18, %20 : vector<16x10xf32>
    %c0_17 = arith.constant 0 : index
    %c0_18 = arith.constant 0 : index
    %22 = vector.load %arg8[%c0_17, %c0_18] : memref<16x10xf32, #tpu.memory_space<vmem>>, vector<16x10xf32>
    tpu.vector_store %arg8[%c0_17, %c0_18], %21 {strides = array<i32>} : memref<16x10xf32, #tpu.memory_space<vmem>>, vector<16x10xf32>,
    return
  }
  func.func @transform_0(%arg0: i32) -> (i32, i32) {
    %c0_i32 = arith.constant 0 : i32
    %c0_i32_0 = arith.constant 0 : i32
    return %arg0, %c0_i32 : i32, i32
  }
  func.func @transform_1(%arg0: i32) -> (i32, i32) {
    %c0_i32 = arith.constant 0 : i32
    %c0_i32_0 = arith.constant 0 : i32
    %c0_i32_1 = arith.constant 0 : i32
    return %c0_i32, %c0_i32_0 : i32, i32
  }
  func.func @transform_2(%arg0: i32) -> (i32, i32) {
    %c0_i32 = arith.constant 0 : i32
    %c0_i32_0 = arith.constant 0 : i32
    %c0_i32_1 = arith.constant 0 : i32
    return %c0_i32, %c0_i32_0 : i32, i32
  }
  func.func @transform_3(%arg0: i32) -> (i32, i32) {
    %c0_i32 = arith.constant 0 : i32
    %c0_i32_0 = arith.constant 0 : i32
    %c0_i32_1 = arith.constant 0 : i32
    return %c0_i32, %c0_i32_0 : i32, i32
  }
  func.func @transform_4(%arg0: i32) -> (i32, i32) {
    %c0_i32 = arith.constant 0 : i32
    %c0_i32_0 = arith.constant 0 : i32
    %c0_i32_1 = arith.constant 0 : i32
    return %c0_i32, %c0_i32_0 : i32, i32
  }
  func.func @transform_5(%arg0: i32) -> (i32, i32) {
    %c0_i32 = arith.constant 0 : i32
    %c0_i32_0 = arith.constant 0 : i32
    %c0_i32_1 = arith.constant 0 : i32
    return %c0_i32, %c0_i32_0 : i32, i32
  }
  func.func @transform_6(%arg0: i32) -> (i32, i32) {
    %c0_i32 = arith.constant 0 : i32
    %c0_i32_0 = arith.constant 0 : i32
    %c0_i32_1 = arith.constant 0 : i32
    return %c0_i32, %c0_i32_0 : i32, i32
  }
  func.func @transform_7(%arg0: i32) -> (i32, i32) {
    %c0_i32 = arith.constant 0 : i32
    %c0_i32_0 = arith.constant 0 : i32
    return %arg0, %c0_i32 : i32, i32
  }
}

</mosaic_0001>

<llo_original>
// kernel: mlp_forward.1
$region0: #{mlp_forward.1}
  #allocation0 [shape = 'u32[]', space=smem, size = 0x4, offset = 0x4, fixed_abs, tag = 'smem constant byte address 0x4 - core index']
  #allocation1 [shape = 'u32[144,128]{1,0:T(1,128)}', space=vmem, size = 0x12000, scoped, tag = 'internal scratch']
  %s0 = inlined_call_operand.vmem [shape: bf16[16,3072], index: 0, kind: input, shape index: {}]
  %s1 = inlined_call_operand.vmem [shape: bf16[3072,64], index: 1, kind: input, shape index: {}]
  %s2 = inlined_call_operand.vmem [shape: f32[1,64], index: 2, kind: input, shape index: {}]
  %s3 = inlined_call_operand.vmem [shape: bf16[64,32], index: 3, kind: input, shape index: {}]
  %s4 = inlined_call_operand.vmem [shape: f32[1,32], index: 4, kind: input, shape index: {}]
  %s5 = inlined_call_operand.vmem [shape: bf16[32,10], index: 5, kind: input, shape index: {}]
  %s6 = inlined_call_operand.vmem [shape: f32[1,10], index: 6, kind: input, shape index: {}]
  %s7 = inlined_call_operand.vmem [shape: f32[16,10], index: 7, kind: output, shape index: {}]
  %s8 = sld [smem:[#allocation0]]
  $region38: #{mlp_forward.1} parent=0
    _
  %s10 = ssub.s32 1, %s8
  %s11 = scalar_select 0, %s10, %s8
  // Predicated region
  $region2: #{mlp_forward.1} parent=0 // pred_check
    _
  $region3: #{mlp_forward.1} parent=0 // pred_check_branch
    %13 = sbr.rel (0) target = $region5
  $region4: #{mlp_forward.1} parent=0 // pred_region
    _
  $region5: #{mlp_forward.1} parent=0 // pred_fallthru
    _
  // Predicated region
  $region6: #{mlp_forward.1} parent=0 // pred_check
    _
  $region7: #{mlp_forward.1} parent=0 // pred_check_branch
    %15 = sbr.rel (0) target = $region9
  $region8: #{mlp_forward.1} parent=0 // pred_region
    _
  $region9: #{mlp_forward.1} parent=0 // pred_fallthru
    _
  // Predicated region
  $region10: #{mlp_forward.1} parent=0 // pred_check
    _
  $region11: #{mlp_forward.1} parent=0 // pred_check_branch
    %17 = sbr.rel (0) target = $region13
  $region12: #{mlp_forward.1} parent=0 // pred_region
    _
  $region13: #{mlp_forward.1} parent=0 // pred_fallthru
    _
  // Predicated region
  $region14: #{mlp_forward.1} parent=0 // pred_check
    _
  $region15: #{mlp_forward.1} parent=0 // pred_check_branch
    %19 = sbr.rel (0) target = $region17
  $region16: #{mlp_forward.1} parent=0 // pred_region
    _
  $region17: #{mlp_forward.1} parent=0 // pred_fallthru
    _
  // Predicated region
  $region18: #{mlp_forward.1} parent=0 // pred_check
    _
  $region19: #{mlp_forward.1} parent=0 // pred_check_branch
    %21 = sbr.rel (0) target = $region21
  $region20: #{mlp_forward.1} parent=0 // pred_region
    _
  $region21: #{mlp_forward.1} parent=0 // pred_fallthru
    _
  // Predicated region
  $region22: #{mlp_forward.1} parent=0 // pred_check
    _
  $region23: #{mlp_forward.1} parent=0 // pred_check_branch
    %23 = sbr.rel (0) target = $region25
  $region24: #{mlp_forward.1} parent=0 // pred_region
    _
  $region25: #{mlp_forward.1} parent=0 // pred_fallthru
    _
  // Predicated region
  $region26: #{mlp_forward.1} parent=0 // pred_check
    _
  $region27: #{mlp_forward.1} parent=0 // pred_check_branch
    %25 = sbr.rel (0) target = $region29
  $region28: #{mlp_forward.1} parent=0 // pred_region
    _
  $region29: #{mlp_forward.1} parent=0 // pred_fallthru
    _
  %v27 = vld [vmem:[%s0] sm:$0xff]
  %v28 = vld [vmem:[%s0 + $0x8] sm:$0xff]
  %v29 = vld [vmem:[%s0 + $0x10] sm:$0xff]
  %v30 = vld [vmem:[%s0 + $0x18] sm:$0xff]
  %v31 = vld [vmem:[%s0 + $0x20] sm:$0xff]
  %v32 = vld [vmem:[%s0 + $0x28] sm:$0xff]
  %v33 = vld [vmem:[%s0 + $0x30] sm:$0xff]
  %v34 = vld [vmem:[%s0 + $0x38] sm:$0xff]
  %v35 = vld [vmem:[%s0 + $0x40] sm:$0xff]
  %v36 = vld [vmem:[%s0 + $0x48] sm:$0xff]
  %v37 = vld [vmem:[%s0 + $0x50] sm:$0xff]
  %v38 = vld [vmem:[%s0 + $0x58] sm:$0xff]
  %v39 = vld [vmem:[%s0 + $0x60] sm:$0xff]
  %v40 = vld [vmem:[%s0 + $0x68] sm:$0xff]
  %v41 = vld [vmem:[%s0 + $0x70] sm:$0xff]
  %v42 = vld [vmem:[%s0 + $0x78] sm:$0xff]
  %v43 = vld [vmem:[%s0 + $0x80] sm:$0xff]
  %v44 = vld [vmem:[%s0 + $0x88] sm:$0xff]
  %v45 = vld [vmem:[%s0 + $0x90] sm:$0xff]
  %v46 = vld [vmem:[%s0 + $0x98] sm:$0xff]
  %v47 = vld [vmem:[%s0 + $0xa0] sm:$0xff]
  %v48 = vld [vmem:[%s0 + $0xa8] sm:$0xff]
  %v49 = vld [vmem:[%s0 + $0xb0] sm:$0xff]
  %v50 = vld [vmem:[%s0 + $0xb8] sm:$0xff]
  %v51 = vld [vmem:[%s1] sm:$0xf]
  %v52 = vld [vmem:[%s1 + $0x4] sm:$0xf]
  %v53 = vld [vmem:[%s1 + $0x8] sm:$0xf]
  %v54 = vld [vmem:[%s1 + $0xc] sm:$0xf]
  %v55 = vld [vmem:[%s1 + $0x10] sm:$0xf]
  %v56 = vld [vmem:[%s1 + $0x14] sm:$0xf]
  %v57 = vld [vmem:[%s1 + $0x18] sm:$0xf]
  %v58 = vld [vmem:[%s1 + $0x1c] sm:$0xf]
  %v59 = vld [vmem:[%s1 + $0x20] sm:$0xf]
  %v60 = vld [vmem:[%s1 + $0x24] sm:$0xf]
  %v61 = vld [vmem:[%s1 + $0x28] sm:$0xf]
  %v62 = vld [vmem:[%s1 + $0x2c] sm:$0xf]
  %v63 = vld [vmem:[%s1 + $0x30] sm:$0xf]
  %v64 = vld [vmem:[%s1 + $0x34] sm:$0xf]
  %v65 = vld [vmem:[%s1 + $0x38] sm:$0xf]
  %v66 = vld [vmem:[%s1 + $0x3c] sm:$0xf]
  %v67 = vld [vmem:[%s1 + $0x40] sm:$0xf]
  %v68 = vld [vmem:[%s1 + $0x44] sm:$0xf]
  %v69 = vld [vmem:[%s1 + $0x48] sm:$0xf]
  %v70 = vld [vmem:[%s1 + $0x4c] sm:$0xf]
  %v71 = vld [vmem:[%s1 + $0x50] sm:$0xf]
  %v72 = vld [vmem:[%s1 + $0x54] sm:$0xf]
  %v73 = vld [vmem:[%s1 + $0x58] sm:$0xf]
  %v74 = vld [vmem:[%s1 + $0x5c] sm:$0xf]
  %v75 = vld [vmem:[%s1 + $0x60] sm:$0xf]
  %v76 = vld [vmem:[%s1 + $0x64] sm:$0xf]
  %v77 = vld [vmem:[%s1 + $0x68] sm:$0xf]
  %v78 = vld [vmem:[%s1 + $0x6c] sm:$0xf]
  %v79 = vld [vmem:[%s1 + $0x70] sm:$0xf]
  %v80 = vld [vmem:[%s1 + $0x74] sm:$0xf]
  %v81 = vld [vmem:[%s1 + $0x78] sm:$0xf]
  %v82 = vld [vmem:[%s1 + $0x7c] sm:$0xf]
  %v83 = vld [vmem:[%s1 + $0x80] sm:$0xf]
  %v84 = vld [vmem:[%s1 + $0x84] sm:$0xf]
  %v85 = vld [vmem:[%s1 + $0x88] sm:$0xf]
  %v86 = vld [vmem:[%s1 + $0x8c] sm:$0xf]
  %v87 = vld [vmem:[%s1 + $0x90] sm:$0xf]
  %v88 = vld [vmem:[%s1 + $0x94] sm:$0xf]
  %v89 = vld [vmem:[%s1 + $0x98] sm:$0xf]
  %v90 = vld [vmem:[%s1 + $0x9c] sm:$0xf]
  %v91 = vld [vmem:[%s1 + $0xa0] sm:$0xf]
  %v92 = vld [vmem:[%s1 + $0xa4] sm:$0xf]
  %v93 = vld [vmem:[%s1 + $0xa8] sm:$0xf]
  %v94 = vld [vmem:[%s1 + $0xac] sm:$0xf]
  %v95 = vld [vmem:[%s1 + $0xb0] sm:$0xf]
  %v96 = vld [vmem:[%s1 + $0xb4] sm:$0xf]
  %v97 = vld [vmem:[%s1 + $0xb8] sm:$0xf]
  %v98 = vld [vmem:[%s1 + $0xbc] sm:$0xf]
  %v99 = vld [vmem:[%s1 + $0xc0] sm:$0xf]
  %v100 = vld [vmem:[%s1 + $0xc4] sm:$0xf]
  %v101 = vld [vmem:[%s1 + $0xc8] sm:$0xf]
  %v102 = vld [vmem:[%s1 + $0xcc] sm:$0xf]
  %v103 = vld [vmem:[%s1 + $0xd0] sm:$0xf]
  %v104 = vld [vmem:[%s1 + $0xd4] sm:$0xf]
  %v105 = vld [vmem:[%s1 + $0xd8] sm:$0xf]
  %v106 = vld [vmem:[%s1 + $0xdc] sm:$0xf]
  %v107 = vld [vmem:[%s1 + $0xe0] sm:$0xf]
  %v108 = vld [vmem:[%s1 + $0xe4] sm:$0xf]
  %v109 = vld [vmem:[%s1 + $0xe8] sm:$0xf]
  %v110 = vld [vmem:[%s1 + $0xec] sm:$0xf]
  %v111 = vld [vmem:[%s1 + $0xf0] sm:$0xf]
  %v112 = vld [vmem:[%s1 + $0xf4] sm:$0xf]
  %v113 = vld [vmem:[%s1 + $0xf8] sm:$0xf]
  %v114 = vld [vmem:[%s1 + $0xfc] sm:$0xf]
  %v115 = vld [vmem:[%s1 + $0x100] sm:$0xf]
  %v116 = vld [vmem:[%s1 + $0x104] sm:$0xf]
  %v117 = vld [vmem:[%s1 + $0x108] sm:$0xf]
  %v118 = vld [vmem:[%s1 + $0x10c] sm:$0xf]
  %v119 = vld [vmem:[%s1 + $0x110] sm:$0xf]
  %v120 = vld [vmem:[%s1 + $0x114] sm:$0xf]
  %v121 = vld [vmem:[%s1 + $0x118] sm:$0xf]
  %v122 = vld [vmem:[%s1 + $0x11c] sm:$0xf]
  %v123 = vld [vmem:[%s1 + $0x120] sm:$0xf]
  %v124 = vld [vmem:[%s1 + $0x124] sm:$0xf]
  %v125 = vld [vmem:[%s1 + $0x128] sm:$0xf]
  %v126 = vld [vmem:[%s1 + $0x12c] sm:$0xf]
  %v127 = vld [vmem:[%s1 + $0x130] sm:$0xf]
  %v128 = vld [vmem:[%s1 + $0x134] sm:$0xf]
  %v129 = vld [vmem:[%s1 + $0x138] sm:$0xf]
  %v130 = vld [vmem:[%s1 + $0x13c] sm:$0xf]
  %v131 = vld [vmem:[%s1 + $0x140] sm:$0xf]
  %v132 = vld [vmem:[%s1 + $0x144] sm:$0xf]
  %v133 = vld [vmem:[%s1 + $0x148] sm:$0xf]
  %v134 = vld [vmem:[%s1 + $0x14c] sm:$0xf]
  %v135 = vld [vmem:[%s1 + $0x150] sm:$0xf]
  %v136 = vld [vmem:[%s1 + $0x154] sm:$0xf]
  %v137 = vld [vmem:[%s1 + $0x158] sm:$0xf]
  %v138 = vld [vmem:[%s1 + $0x15c] sm:$0xf]
  %v139 = vld [vmem:[%s1 + $0x160] sm:$0xf]
  %v140 = vld [vmem:[%s1 + $0x164] sm:$0xf]
  %v141 = vld [vmem:[%s1 + $0x168] sm:$0xf]
  %v142 = vld [vmem:[%s1 + $0x16c] sm:$0xf]
  %v143 = vld [vmem:[%s1 + $0x170] sm:$0xf]
  %v144 = vld [vmem:[%s1 + $0x174] sm:$0xf]
  %v145 = vld [vmem:[%s1 + $0x178] sm:$0xf]
  %v146 = vld [vmem:[%s1 + $0x17c] sm:$0xf]
  %v147 = vld [vmem:[%s1 + $0x180] sm:$0xf]
  %v148 = vld [vmem:[%s1 + $0x184] sm:$0xf]
  %v149 = vld [vmem:[%s1 + $0x188] sm:$0xf]
  %v150 = vld [vmem:[%s1 + $0x18c] sm:$0xf]
  %v151 = vld [vmem:[%s1 + $0x190] sm:$0xf]
  %v152 = vld [vmem:[%s1 + $0x194] sm:$0xf]
  %v153 = vld [vmem:[%s1 + $0x198] sm:$0xf]
  %v154 = vld [vmem:[%s1 + $0x19c] sm:$0xf]
  %v155 = vld [vmem:[%s1 + $0x1a0] sm:$0xf]
  %v156 = vld [vmem:[%s1 + $0x1a4] sm:$0xf]
  %v157 = vld [vmem:[%s1 + $0x1a8] sm:$0xf]
  %v158 = vld [vmem:[%s1 + $0x1ac] sm:$0xf]
  %v159 = vld [vmem:[%s1 + $0x1b0] sm:$0xf]
  %v160 = vld [vmem:[%s1 + $0x1b4] sm:$0xf]
  %v161 = vld [vmem:[%s1 + $0x1b8] sm:$0xf]
  %v162 = vld [vmem:[%s1 + $0x1bc] sm:$0xf]
  %v163 = vld [vmem:[%s1 + $0x1c0] sm:$0xf]
  %v164 = vld [vmem:[%s1 + $0x1c4] sm:$0xf]
  %v165 = vld [vmem:[%s1 + $0x1c8] sm:$0xf]
  %v166 = vld [vmem:[%s1 + $0x1cc] sm:$0xf]
  %v167 = vld [vmem:[%s1 + $0x1d0] sm:$0xf]
  %v168 = vld [vmem:[%s1 + $0x1d4] sm:$0xf]
  %v169 = vld [vmem:[%s1 + $0x1d8] sm:$0xf]
  %v170 = vld [vmem:[%s1 + $0x1dc] sm:$0xf]
  %v171 = vld [vmem:[%s1 + $0x1e0] sm:$0xf]
  %v172 = vld [vmem:[%s1 + $0x1e4] sm:$0xf]
  %v173 = vld [vmem:[%s1 + $0x1e8] sm:$0xf]
  %v174 = vld [vmem:[%s1 + $0x1ec] sm:$0xf]
  %v175 = vld [vmem:[%s1 + $0x1f0] sm:$0xf]
  %v176 = vld [vmem:[%s1 + $0x1f4] sm:$0xf]
  %v177 = vld [vmem:[%s1 + $0x1f8] sm:$0xf]
  %v178 = vld [vmem:[%s1 + $0x1fc] sm:$0xf]
  %v179 = vld [vmem:[%s1 + $0x200] sm:$0xf]
  %v180 = vld [vmem:[%s1 + $0x204] sm:$0xf]
  %v181 = vld [vmem:[%s1 + $0x208] sm:$0xf]
  %v182 = vld [vmem:[%s1 + $0x20c] sm:$0xf]
  %v183 = vld [vmem:[%s1 + $0x210] sm:$0xf]
  %v184 = vld [vmem:[%s1 + $0x214] sm:$0xf]
  %v185 = vld [vmem:[%s1 + $0x218] sm:$0xf]
  %v186 = vld [vmem:[%s1 + $0x21c] sm:$0xf]
  %v187 = vld [vmem:[%s1 + $0x220] sm:$0xf]
  %v188 = vld [vmem:[%s1 + $0x224] sm:$0xf]
  %v189 = vld [vmem:[%s1 + $0x228] sm:$0xf]
  %v190 = vld [vmem:[%s1 + $0x22c] sm:$0xf]
  %v191 = vld [vmem:[%s1 + $0x230] sm:$0xf]
  %v192 = vld [vmem:[%s1 + $0x234] sm:$0xf]
  %v193 = vld [vmem:[%s1 + $0x238] sm:$0xf]
  %v194 = vld [vmem:[%s1 + $0x23c] sm:$0xf]
  %v195 = vld [vmem:[%s1 + $0x240] sm:$0xf]
  %v196 = vld [vmem:[%s1 + $0x244] sm:$0xf]
  %v197 = vld [vmem:[%s1 + $0x248] sm:$0xf]
  %v198 = vld [vmem:[%s1 + $0x24c] sm:$0xf]
  %v199 = vld [vmem:[%s1 + $0x250] sm:$0xf]
  %v200 = vld [vmem:[%s1 + $0x254] sm:$0xf]
  %v201 = vld [vmem:[%s1 + $0x258] sm:$0xf]
  %v202 = vld [vmem:[%s1 + $0x25c] sm:$0xf]
  %v203 = vld [vmem:[%s1 + $0x260] sm:$0xf]
  %v204 = vld [vmem:[%s1 + $0x264] sm:$0xf]
  %v205 = vld [vmem:[%s1 + $0x268] sm:$0xf]
  %v206 = vld [vmem:[%s1 + $0x26c] sm:$0xf]
  %v207 = vld [vmem:[%s1 + $0x270] sm:$0xf]
  %v208 = vld [vmem:[%s1 + $0x274] sm:$0xf]
  %v209 = vld [vmem:[%s1 + $0x278] sm:$0xf]
  %v210 = vld [vmem:[%s1 + $0x27c] sm:$0xf]
  %v211 = vld [vmem:[%s1 + $0x280] sm:$0xf]
  %v212 = vld [vmem:[%s1 + $0x284] sm:$0xf]
  %v213 = vld [vmem:[%s1 + $0x288] sm:$0xf]
  %v214 = vld [vmem:[%s1 + $0x28c] sm:$0xf]
  %v215 = vld [vmem:[%s1 + $0x290] sm:$0xf]
  %v216 = vld [vmem:[%s1 + $0x294] sm:$0xf]
  %v217 = vld [vmem:[%s1 + $0x298] sm:$0xf]
  %v218 = vld [vmem:[%s1 + $0x29c] sm:$0xf]
  %v219 = vld [vmem:[%s1 + $0x2a0] sm:$0xf]
  %v220 = vld [vmem:[%s1 + $0x2a4] sm:$0xf]
  %v221 = vld [vmem:[%s1 + $0x2a8] sm:$0xf]
  %v222 = vld [vmem:[%s1 + $0x2ac] sm:$0xf]
  %v223 = vld [vmem:[%s1 + $0x2b0] sm:$0xf]
  %v224 = vld [vmem:[%s1 + $0x2b4] sm:$0xf]
  %v225 = vld [vmem:[%s1 + $0x2b8] sm:$0xf]
  %v226 = vld [vmem:[%s1 + $0x2bc] sm:$0xf]
  %v227 = vld [vmem:[%s1 + $0x2c0] sm:$0xf]
  %v228 = vld [vmem:[%s1 + $0x2c4] sm:$0xf]
  %v229 = vld [vmem:[%s1 + $0x2c8] sm:$0xf]
  %v230 = vld [vmem:[%s1 + $0x2cc] sm:$0xf]
  %v231 = vld [vmem:[%s1 + $0x2d0] sm:$0xf]
  %v232 = vld [vmem:[%s1 + $0x2d4] sm:$0xf]
  %v233 = vld [vmem:[%s1 + $0x2d8] sm:$0xf]
  %v234 = vld [vmem:[%s1 + $0x2dc] sm:$0xf]
  %v235 = vld [vmem:[%s1 + $0x2e0] sm:$0xf]
  %v236 = vld [vmem:[%s1 + $0x2e4] sm:$0xf]
  %v237 = vld [vmem:[%s1 + $0x2e8] sm:$0xf]
  %v238 = vld [vmem:[%s1 + $0x2ec] sm:$0xf]
  %v239 = vld [vmem:[%s1 + $0x2f0] sm:$0xf]
  %v240 = vld [vmem:[%s1 + $0x2f4] sm:$0xf]
  %v241 = vld [vmem:[%s1 + $0x2f8] sm:$0xf]
  %v242 = vld [vmem:[%s1 + $0x2fc] sm:$0xf]
  %v243 = vld [vmem:[%s1 + $0x300] sm:$0xf]
  %v244 = vld [vmem:[%s1 + $0x304] sm:$0xf]
  %v245 = vld [vmem:[%s1 + $0x308] sm:$0xf]
  %v246 = vld [vmem:[%s1 + $0x30c] sm:$0xf]
  %v247 = vld [vmem:[%s1 + $0x310] sm:$0xf]
  %v248 = vld [vmem:[%s1 + $0x314] sm:$0xf]
  %v249 = vld [vmem:[%s1 + $0x318] sm:$0xf]
  %v250 = vld [vmem:[%s1 + $0x31c] sm:$0xf]
  %v251 = vld [vmem:[%s1 + $0x320] sm:$0xf]
  %v252 = vld [vmem:[%s1 + $0x324] sm:$0xf]
  %v253 = vld [vmem:[%s1 + $0x328] sm:$0xf]
  %v254 = vld [vmem:[%s1 + $0x32c] sm:$0xf]
  %v255 = vld [vmem:[%s1 + $0x330] sm:$0xf]
  %v256 = vld [vmem:[%s1 + $0x334] sm:$0xf]
  %v257 = vld [vmem:[%s1 + $0x338] sm:$0xf]
  %v258 = vld [vmem:[%s1 + $0x33c] sm:$0xf]
  %v259 = vld [vmem:[%s1 + $0x340] sm:$0xf]
  %v260 = vld [vmem:[%s1 + $0x344] sm:$0xf]
  %v261 = vld [vmem:[%s1 + $0x348] sm:$0xf]
  %v262 = vld [vmem:[%s1 + $0x34c] sm:$0xf]
  %v263 = vld [vmem:[%s1 + $0x350] sm:$0xf]
  %v264 = vld [vmem:[%s1 + $0x354] sm:$0xf]
  %v265 = vld [vmem:[%s1 + $0x358] sm:$0xf]
  %v266 = vld [vmem:[%s1 + $0x35c] sm:$0xf]
  %v267 = vld [vmem:[%s1 + $0x360] sm:$0xf]
  %v268 = vld [vmem:[%s1 + $0x364] sm:$0xf]
  %v269 = vld [vmem:[%s1 + $0x368] sm:$0xf]
  %v270 = vld [vmem:[%s1 + $0x36c] sm:$0xf]
  %v271 = vld [vmem:[%s1 + $0x370] sm:$0xf]
  %v272 = vld [vmem:[%s1 + $0x374] sm:$0xf]
  %v273 = vld [vmem:[%s1 + $0x378] sm:$0xf]
  %v274 = vld [vmem:[%s1 + $0x37c] sm:$0xf]
  %v275 = vld [vmem:[%s1 + $0x380] sm:$0xf]
  %v276 = vld [vmem:[%s1 + $0x384] sm:$0xf]
  %v277 = vld [vmem:[%s1 + $0x388] sm:$0xf]
  %v278 = vld [vmem:[%s1 + $0x38c] sm:$0xf]
  %v279 = vld [vmem:[%s1 + $0x390] sm:$0xf]
  %v280 = vld [vmem:[%s1 + $0x394] sm:$0xf]
  %v281 = vld [vmem:[%s1 + $0x398] sm:$0xf]
  %v282 = vld [vmem:[%s1 + $0x39c] sm:$0xf]
  %v283 = vld [vmem:[%s1 + $0x3a0] sm:$0xf]
  %v284 = vld [vmem:[%s1 + $0x3a4] sm:$0xf]
  %v285 = vld [vmem:[%s1 + $0x3a8] sm:$0xf]
  %v286 = vld [vmem:[%s1 + $0x3ac] sm:$0xf]
  %v287 = vld [vmem:[%s1 + $0x3b0] sm:$0xf]
  %v288 = vld [vmem:[%s1 + $0x3b4] sm:$0xf]
  %v289 = vld [vmem:[%s1 + $0x3b8] sm:$0xf]
  %v290 = vld [vmem:[%s1 + $0x3bc] sm:$0xf]
  %v291 = vld [vmem:[%s1 + $0x3c0] sm:$0xf]
  %v292 = vld [vmem:[%s1 + $0x3c4] sm:$0xf]
  %v293 = vld [vmem:[%s1 + $0x3c8] sm:$0xf]
  %v294 = vld [vmem:[%s1 + $0x3cc] sm:$0xf]
  %v295 = vld [vmem:[%s1 + $0x3d0] sm:$0xf]
  %v296 = vld [vmem:[%s1 + $0x3d4] sm:$0xf]
  %v297 = vld [vmem:[%s1 + $0x3d8] sm:$0xf]
  %v298 = vld [vmem:[%s1 + $0x3dc] sm:$0xf]
  %v299 = vld [vmem:[%s1 + $0x3e0] sm:$0xf]
  %v300 = vld [vmem:[%s1 + $0x3e4] sm:$0xf]
  %v301 = vld [vmem:[%s1 + $0x3e8] sm:$0xf]
  %v302 = vld [vmem:[%s1 + $0x3ec] sm:$0xf]
  %v303 = vld [vmem:[%s1 + $0x3f0] sm:$0xf]
  %v304 = vld [vmem:[%s1 + $0x3f4] sm:$0xf]
  %v305 = vld [vmem:[%s1 + $0x3f8] sm:$0xf]
  %v306 = vld [vmem:[%s1 + $0x3fc] sm:$0xf]
  %v307 = vld [vmem:[%s1 + $0x400] sm:$0xf]
  %v308 = vld [vmem:[%s1 + $0x404] sm:$0xf]
  %v309 = vld [vmem:[%s1 + $0x408] sm:$0xf]
  %v310 = vld [vmem:[%s1 + $0x40c] sm:$0xf]
  %v311 = vld [vmem:[%s1 + $0x410] sm:$0xf]
  %v312 = vld [vmem:[%s1 + $0x414] sm:$0xf]
  %v313 = vld [vmem:[%s1 + $0x418] sm:$0xf]
  %v314 = vld [vmem:[%s1 + $0x41c] sm:$0xf]
  %v315 = vld [vmem:[%s1 + $0x420] sm:$0xf]
  %v316 = vld [vmem:[%s1 + $0x424] sm:$0xf]
  %v317 = vld [vmem:[%s1 + $0x428] sm:$0xf]
  %v318 = vld [vmem:[%s1 + $0x42c] sm:$0xf]
  %v319 = vld [vmem:[%s1 + $0x430] sm:$0xf]
  %v320 = vld [vmem:[%s1 + $0x434] sm:$0xf]
  %v321 = vld [vmem:[%s1 + $0x438] sm:$0xf]
  %v322 = vld [vmem:[%s1 + $0x43c] sm:$0xf]
  %v323 = vld [vmem:[%s1 + $0x440] sm:$0xf]
  %v324 = vld [vmem:[%s1 + $0x444] sm:$0xf]
  %v325 = vld [vmem:[%s1 + $0x448] sm:$0xf]
  %v326 = vld [vmem:[%s1 + $0x44c] sm:$0xf]
  %v327 = vld [vmem:[%s1 + $0x450] sm:$0xf]
  %v328 = vld [vmem:[%s1 + $0x454] sm:$0xf]
  %v329 = vld [vmem:[%s1 + $0x458] sm:$0xf]
  %v330 = vld [vmem:[%s1 + $0x45c] sm:$0xf]
  %v331 = vld [vmem:[%s1 + $0x460] sm:$0xf]
  %v332 = vld [vmem:[%s1 + $0x464] sm:$0xf]
  %v333 = vld [vmem:[%s1 + $0x468] sm:$0xf]
  %v334 = vld [vmem:[%s1 + $0x46c] sm:$0xf]
  %v335 = vld [vmem:[%s1 + $0x470] sm:$0xf]
  %v336 = vld [vmem:[%s1 + $0x474] sm:$0xf]
  %v337 = vld [vmem:[%s1 + $0x478] sm:$0xf]
  %v338 = vld [vmem:[%s1 + $0x47c] sm:$0xf]
  %v339 = vld [vmem:[%s1 + $0x480] sm:$0xf]
  %v340 = vld [vmem:[%s1 + $0x484] sm:$0xf]
  %v341 = vld [vmem:[%s1 + $0x488] sm:$0xf]
  %v342 = vld [vmem:[%s1 + $0x48c] sm:$0xf]
  %v343 = vld [vmem:[%s1 + $0x490] sm:$0xf]
  %v344 = vld [vmem:[%s1 + $0x494] sm:$0xf]
  %v345 = vld [vmem:[%s1 + $0x498] sm:$0xf]
  %v346 = vld [vmem:[%s1 + $0x49c] sm:$0xf]
  %v347 = vld [vmem:[%s1 + $0x4a0] sm:$0xf]
  %v348 = vld [vmem:[%s1 + $0x4a4] sm:$0xf]
  %v349 = vld [vmem:[%s1 + $0x4a8] sm:$0xf]
  %v350 = vld [vmem:[%s1 + $0x4ac] sm:$0xf]
  %v351 = vld [vmem:[%s1 + $0x4b0] sm:$0xf]
  %v352 = vld [vmem:[%s1 + $0x4b4] sm:$0xf]
  %v353 = vld [vmem:[%s1 + $0x4b8] sm:$0xf]
  %v354 = vld [vmem:[%s1 + $0x4bc] sm:$0xf]
  %v355 = vld [vmem:[%s1 + $0x4c0] sm:$0xf]
  %v356 = vld [vmem:[%s1 + $0x4c4] sm:$0xf]
  %v357 = vld [vmem:[%s1 + $0x4c8] sm:$0xf]
  %v358 = vld [vmem:[%s1 + $0x4cc] sm:$0xf]
  %v359 = vld [vmem:[%s1 + $0x4d0] sm:$0xf]
  %v360 = vld [vmem:[%s1 + $0x4d4] sm:$0xf]
  %v361 = vld [vmem:[%s1 + $0x4d8] sm:$0xf]
  %v362 = vld [vmem:[%s1 + $0x4dc] sm:$0xf]
  %v363 = vld [vmem:[%s1 + $0x4e0] sm:$0xf]
  %v364 = vld [vmem:[%s1 + $0x4e4] sm:$0xf]
  %v365 = vld [vmem:[%s1 + $0x4e8] sm:$0xf]
  %v366 = vld [vmem:[%s1 + $0x4ec] sm:$0xf]
  %v367 = vld [vmem:[%s1 + $0x4f0] sm:$0xf]
  %v368 = vld [vmem:[%s1 + $0x4f4] sm:$0xf]
  %v369 = vld [vmem:[%s1 + $0x4f8] sm:$0xf]
  %v370 = vld [vmem:[%s1 + $0x4fc] sm:$0xf]
  %v371 = vld [vmem:[%s1 + $0x500] sm:$0xf]
  %v372 = vld [vmem:[%s1 + $0x504] sm:$0xf]
  %v373 = vld [vmem:[%s1 + $0x508] sm:$0xf]
  %v374 = vld [vmem:[%s1 + $0x50c] sm:$0xf]
  %v375 = vld [vmem:[%s1 + $0x510] sm:$0xf]
  %v376 = vld [vmem:[%s1 + $0x514] sm:$0xf]
  %v377 = vld [vmem:[%s1 + $0x518] sm:$0xf]
  %v378 = vld [vmem:[%s1 + $0x51c] sm:$0xf]
  %v379 = vld [vmem:[%s1 + $0x520] sm:$0xf]
  %v380 = vld [vmem:[%s1 + $0x524] sm:$0xf]
  %v381 = vld [vmem:[%s1 + $0x528] sm:$0xf]
  %v382 = vld [vmem:[%s1 + $0x52c] sm:$0xf]
  %v383 = vld [vmem:[%s1 + $0x530] sm:$0xf]
  %v384 = vld [vmem:[%s1 + $0x534] sm:$0xf]
  %v385 = vld [vmem:[%s1 + $0x538] sm:$0xf]
  %v386 = vld [vmem:[%s1 + $0x53c] sm:$0xf]
  %v387 = vld [vmem:[%s1 + $0x540] sm:$0xf]
  %v388 = vld [vmem:[%s1 + $0x544] sm:$0xf]
  %v389 = vld [vmem:[%s1 + $0x548] sm:$0xf]
  %v390 = vld [vmem:[%s1 + $0x54c] sm:$0xf]
  %v391 = vld [vmem:[%s1 + $0x550] sm:$0xf]
  %v392 = vld [vmem:[%s1 + $0x554] sm:$0xf]
  %v393 = vld [vmem:[%s1 + $0x558] sm:$0xf]
  %v394 = vld [vmem:[%s1 + $0x55c] sm:$0xf]
  %v395 = vld [vmem:[%s1 + $0x560] sm:$0xf]
  %v396 = vld [vmem:[%s1 + $0x564] sm:$0xf]
  %v397 = vld [vmem:[%s1 + $0x568] sm:$0xf]
  %v398 = vld [vmem:[%s1 + $0x56c] sm:$0xf]
  %v399 = vld [vmem:[%s1 + $0x570] sm:$0xf]
  %v400 = vld [vmem:[%s1 + $0x574] sm:$0xf]
  %v401 = vld [vmem:[%s1 + $0x578] sm:$0xf]
  %v402 = vld [vmem:[%s1 + $0x57c] sm:$0xf]
  %v403 = vld [vmem:[%s1 + $0x580] sm:$0xf]
  %v404 = vld [vmem:[%s1 + $0x584] sm:$0xf]
  %v405 = vld [vmem:[%s1 + $0x588] sm:$0xf]
  %v406 = vld [vmem:[%s1 + $0x58c] sm:$0xf]
  %v407 = vld [vmem:[%s1 + $0x590] sm:$0xf]
  %v408 = vld [vmem:[%s1 + $0x594] sm:$0xf]
  %v409 = vld [vmem:[%s1 + $0x598] sm:$0xf]
  %v410 = vld [vmem:[%s1 + $0x59c] sm:$0xf]
  %v411 = vld [vmem:[%s1 + $0x5a0] sm:$0xf]
  %v412 = vld [vmem:[%s1 + $0x5a4] sm:$0xf]
  %v413 = vld [vmem:[%s1 + $0x5a8] sm:$0xf]
  %v414 = vld [vmem:[%s1 + $0x5ac] sm:$0xf]
  %v415 = vld [vmem:[%s1 + $0x5b0] sm:$0xf]
  %v416 = vld [vmem:[%s1 + $0x5b4] sm:$0xf]
  %v417 = vld [vmem:[%s1 + $0x5b8] sm:$0xf]
  %v418 = vld [vmem:[%s1 + $0x5bc] sm:$0xf]
  %v419 = vld [vmem:[%s1 + $0x5c0] sm:$0xf]
  %v420 = vld [vmem:[%s1 + $0x5c4] sm:$0xf]
  %v421 = vld [vmem:[%s1 + $0x5c8] sm:$0xf]
  %v422 = vld [vmem:[%s1 + $0x5cc] sm:$0xf]
  %v423 = vld [vmem:[%s1 + $0x5d0] sm:$0xf]
  %v424 = vld [vmem:[%s1 + $0x5d4] sm:$0xf]
  %v425 = vld [vmem:[%s1 + $0x5d8] sm:$0xf]
  %v426 = vld [vmem:[%s1 + $0x5dc] sm:$0xf]
  %v427 = vld [vmem:[%s1 + $0x5e0] sm:$0xf]
  %v428 = vld [vmem:[%s1 + $0x5e4] sm:$0xf]
  %v429 = vld [vmem:[%s1 + $0x5e8] sm:$0xf]
  %v430 = vld [vmem:[%s1 + $0x5ec] sm:$0xf]
  %v431 = vld [vmem:[%s1 + $0x5f0] sm:$0xf]
  %v432 = vld [vmem:[%s1 + $0x5f4] sm:$0xf]
  %v433 = vld [vmem:[%s1 + $0x5f8] sm:$0xf]
  %v434 = vld [vmem:[%s1 + $0x5fc] sm:$0xf]
  %v435 = vld [vmem:[%s2] sm:$0x1]
  %v437 = vlaneseq
  %v438 = vshrl.u32 %v437, 7
  %v439 = vsub.s32 0, %v438
  %v440 = vrot.slane %v435, %v439
  %v466 = vunpack.c.l.b16 %v27
  %v467 = vunpack.c.h.b16 %v27
  %v468 = vunpack.c.l.b16 %v28
  %v469 = vunpack.c.h.b16 %v28
  %v470 = vunpack.c.l.b16 %v29
  %v471 = vunpack.c.h.b16 %v29
  %v472 = vunpack.c.l.b16 %v30
  %v473 = vunpack.c.h.b16 %v30
  %v474 = vunpack.c.l.b16 %v31
  %v475 = vunpack.c.h.b16 %v31
  %v476 = vunpack.c.l.b16 %v32
  %v477 = vunpack.c.h.b16 %v32
  %v478 = vunpack.c.l.b16 %v33
  %v479 = vunpack.c.h.b16 %v33
  %v480 = vunpack.c.l.b16 %v34
  %v481 = vunpack.c.h.b16 %v34
  %v482 = vunpack.c.l.b16 %v35
  %v483 = vunpack.c.h.b16 %v35
  %v484 = vunpack.c.l.b16 %v36
  %v485 = vunpack.c.h.b16 %v36
  %v486 = vunpack.c.l.b16 %v37
  %v487 = vunpack.c.h.b16 %v37
  %v488 = vunpack.c.l.b16 %v38
  %v489 = vunpack.c.h.b16 %v38
  %v490 = vunpack.c.l.b16 %v39
  %v491 = vunpack.c.h.b16 %v39
  %v492 = vunpack.c.l.b16 %v40
  %v493 = vunpack.c.h.b16 %v40
  %v494 = vunpack.c.l.b16 %v41
  %v495 = vunpack.c.h.b16 %v41
  %v496 = vunpack.c.l.b16 %v42
  %v497 = vunpack.c.h.b16 %v42
  %v498 = vunpack.c.l.b16 %v43
  %v499 = vunpack.c.h.b16 %v43
  %v500 = vunpack.c.l.b16 %v44
  %v501 = vunpack.c.h.b16 %v44
  %v502 = vunpack.c.l.b16 %v45
  %v503 = vunpack.c.h.b16 %v45
  %v504 = vunpack.c.l.b16 %v46
  %v505 = vunpack.c.h.b16 %v46
  %v506 = vunpack.c.l.b16 %v47
  %v507 = vunpack.c.h.b16 %v47
  %v508 = vunpack.c.l.b16 %v48
  %v509 = vunpack.c.h.b16 %v48
  %v510 = vunpack.c.l.b16 %v49
  %v511 = vunpack.c.h.b16 %v49
  %v512 = vunpack.c.l.b16 %v50
  %v513 = vunpack.c.h.b16 %v50
  %v514 = vpack.c.b16 %v490, %v466
  %v515 = vpack.c.b16 %v491, %v467
  %v516 = vpack.c.b16 %v492, %v468
  %v517 = vpack.c.b16 %v493, %v469
  %v518 = vpack.c.b16 %v494, %v470
  %v519 = vpack.c.b16 %v495, %v471
  %v520 = vpack.c.b16 %v496, %v472
  %v521 = vpack.c.b16 %v497, %v473
  %v522 = vpack.c.b16 %v498, %v474
  %v523 = vpack.c.b16 %v499, %v475
  %v524 = vpack.c.b16 %v500, %v476
  %v525 = vpack.c.b16 %v501, %v477
  %v526 = vpack.c.b16 %v502, %v478
  %v527 = vpack.c.b16 %v503, %v479
  %v528 = vpack.c.b16 %v504, %v480
  %v529 = vpack.c.b16 %v505, %v481
  %v530 = vpack.c.b16 %v506, %v482
  %v531 = vpack.c.b16 %v507, %v483
  %v532 = vpack.c.b16 %v508, %v484
  %v533 = vpack.c.b16 %v509, %v485
  %v534 = vpack.c.b16 %v510, %v486
  %v535 = vpack.c.b16 %v511, %v487
  %v536 = vpack.c.b16 %v512, %v488
  %v537 = vpack.c.b16 %v513, %v489
  %v946 = vunpack.c.l.b16 %v51
  %v947 = vunpack.c.l.b16 %v52
  %v948 = vunpack.c.l.b16 %v53
  %v949 = vunpack.c.l.b16 %v54
  %v950 = vunpack.c.l.b16 %v55
  %v951 = vunpack.c.l.b16 %v56
  %v952 = vunpack.c.l.b16 %v57
  %v953 = vunpack.c.l.b16 %v58
  %v954 = vunpack.c.l.b16 %v59
  %v955 = vunpack.c.l.b16 %v60
  %v956 = vunpack.c.l.b16 %v61
  %v957 = vunpack.c.l.b16 %v62
  %v958 = vunpack.c.l.b16 %v63
  %v959 = vunpack.c.l.b16 %v64
  %v960 = vunpack.c.l.b16 %v65
  %v961 = vunpack.c.l.b16 %v66
  %v962 = vunpack.c.l.b16 %v67
  %v963 = vunpack.c.l.b16 %v68
  %v964 = vunpack.c.l.b16 %v69
  %v965 = vunpack.c.l.b16 %v70
  %v966 = vunpack.c.l.b16 %v71
  %v967 = vunpack.c.l.b16 %v72
  %v968 = vunpack.c.l.b16 %v73
  %v969 = vunpack.c.l.b16 %v74
  %v970 = vunpack.c.l.b16 %v75
  %v971 = vunpack.c.l.b16 %v76
  %v972 = vunpack.c.l.b16 %v77
  %v973 = vunpack.c.l.b16 %v78
  %v974 = vunpack.c.l.b16 %v79
  %v975 = vunpack.c.l.b16 %v80
  %v976 = vunpack.c.l.b16 %v81
  %v977 = vunpack.c.l.b16 %v82
  %v978 = vunpack.c.l.b16 %v83
  %v979 = vunpack.c.l.b16 %v84
  %v980 = vunpack.c.l.b16 %v85
  %v981 = vunpack.c.l.b16 %v86
  %v982 = vunpack.c.l.b16 %v87
  %v983 = vunpack.c.l.b16 %v88
  %v984 = vunpack.c.l.b16 %v89
  %v985 = vunpack.c.l.b16 %v90
  %v986 = vunpack.c.l.b16 %v91
  %v987 = vunpack.c.l.b16 %v92
  %v988 = vunpack.c.l.b16 %v93
  %v989 = vunpack.c.l.b16 %v94
  %v990 = vunpack.c.l.b16 %v95
  %v991 = vunpack.c.l.b16 %v96
  %v992 = vunpack.c.l.b16 %v97
  %v993 = vunpack.c.l.b16 %v98
  %v994 = vunpack.c.l.b16 %v99
  %v995 = vunpack.c.l.b16 %v100
  %v996 = vunpack.c.l.b16 %v101
  %v997 = vunpack.c.l.b16 %v102
  %v998 = vunpack.c.l.b16 %v103
  %v999 = vunpack.c.l.b16 %v104
  %v1000 = vunpack.c.l.b16 %v105
  %v1001 = vunpack.c.l.b16 %v106
  %v1002 = vunpack.c.l.b16 %v107
  %v1003 = vunpack.c.l.b16 %v108
  %v1004 = vunpack.c.l.b16 %v109
  %v1005 = vunpack.c.l.b16 %v110
  %v1006 = vunpack.c.l.b16 %v111
  %v1007 = vunpack.c.l.b16 %v112
  %v1008 = vunpack.c.l.b16 %v113
  %v1009 = vunpack.c.l.b16 %v114
  %v1010 = vunpack.c.l.b16 %v115
  %v1011 = vunpack.c.l.b16 %v116
  %v1012 = vunpack.c.l.b16 %v117
  %v1013 = vunpack.c.l.b16 %v118
  %v1014 = vunpack.c.l.b16 %v119
  %v1015 = vunpack.c.l.b16 %v120
  %v1016 = vunpack.c.l.b16 %v121
  %v1017 = vunpack.c.l.b16 %v122
  %v1018 = vunpack.c.l.b16 %v123
  %v1019 = vunpack.c.l.b16 %v124
  %v1020 = vunpack.c.l.b16 %v125
  %v1021 = vunpack.c.l.b16 %v126
  %v1022 = vunpack.c.l.b16 %v127
  %v1023 = vunpack.c.l.b16 %v128
  %v1024 = vunpack.c.l.b16 %v129
  %v1025 = vunpack.c.l.b16 %v130
  %v1026 = vunpack.c.l.b16 %v131
  %v1027 = vunpack.c.l.b16 %v132
  %v1028 = vunpack.c.l.b16 %v133
  %v1029 = vunpack.c.l.b16 %v134
  %v1030 = vunpack.c.l.b16 %v135
  %v1031 = vunpack.c.l.b16 %v136
  %v1032 = vunpack.c.l.b16 %v137
  %v1033 = vunpack.c.l.b16 %v138
  %v1034 = vunpack.c.l.b16 %v139
  %v1035 = vunpack.c.l.b16 %v140
  %v1036 = vunpack.c.l.b16 %v141
  %v1037 = vunpack.c.l.b16 %v142
  %v1038 = vunpack.c.l.b16 %v143
  %v1039 = vunpack.c.l.b16 %v144
  %v1040 = vunpack.c.l.b16 %v145
  %v1041 = vunpack.c.l.b16 %v146
  %v1042 = vunpack.c.l.b16 %v147
  %v1043 = vunpack.c.l.b16 %v148
  %v1044 = vunpack.c.l.b16 %v149
  %v1045 = vunpack.c.l.b16 %v150
  %v1046 = vunpack.c.l.b16 %v151
  %v1047 = vunpack.c.l.b16 %v152
  %v1048 = vunpack.c.l.b16 %v153
  %v1049 = vunpack.c.l.b16 %v154
  %v1050 = vunpack.c.l.b16 %v155
  %v1051 = vunpack.c.l.b16 %v156
  %v1052 = vunpack.c.l.b16 %v157
  %v1053 = vunpack.c.l.b16 %v158
  %v1054 = vunpack.c.l.b16 %v159
  %v1055 = vunpack.c.l.b16 %v160
  %v1056 = vunpack.c.l.b16 %v161
  %v1057 = vunpack.c.l.b16 %v162
  %v1058 = vunpack.c.l.b16 %v163
  %v1059 = vunpack.c.l.b16 %v164
  %v1060 = vunpack.c.l.b16 %v165
  %v1061 = vunpack.c.l.b16 %v166
  %v1062 = vunpack.c.l.b16 %v167
  %v1063 = vunpack.c.l.b16 %v168
  %v1064 = vunpack.c.l.b16 %v169
  %v1065 = vunpack.c.l.b16 %v170
  %v1066 = vunpack.c.l.b16 %v171
  %v1067 = vunpack.c.l.b16 %v172
  %v1068 = vunpack.c.l.b16 %v173
  %v1069 = vunpack.c.l.b16 %v174
  %v1070 = vunpack.c.l.b16 %v175
  %v1071 = vunpack.c.l.b16 %v176
  %v1072 = vunpack.c.l.b16 %v177
  %v1073 = vunpack.c.l.b16 %v178
  %v1074 = vunpack.c.l.b16 %v179
  %v1075 = vunpack.c.l.b16 %v180
  %v1076 = vunpack.c.l.b16 %v181
  %v1077 = vunpack.c.l.b16 %v182
  %v1078 = vunpack.c.l.b16 %v183
  %v1079 = vunpack.c.l.b16 %v184
  %v1080 = vunpack.c.l.b16 %v185
  %v1081 = vunpack.c.l.b16 %v186
  %v1082 = vunpack.c.l.b16 %v187
  %v1083 = vunpack.c.l.b16 %v188
  %v1084 = vunpack.c.l.b16 %v189
  %v1085 = vunpack.c.l.b16 %v190
  %v1086 = vunpack.c.l.b16 %v191
  %v1087 = vunpack.c.l.b16 %v192
  %v1088 = vunpack.c.l.b16 %v193
  %v1089 = vunpack.c.l.b16 %v194
  %v1090 = vunpack.c.l.b16 %v195
  %v1091 = vunpack.c.l.b16 %v196
  %v1092 = vunpack.c.l.b16 %v197
  %v1093 = vunpack.c.l.b16 %v198
  %v1094 = vunpack.c.l.b16 %v199
  %v1095 = vunpack.c.l.b16 %v200
  %v1096 = vunpack.c.l.b16 %v201
  %v1097 = vunpack.c.l.b16 %v202
  %v1098 = vunpack.c.l.b16 %v203
  %v1099 = vunpack.c.l.b16 %v204
  %v1100 = vunpack.c.l.b16 %v205
  %v1101 = vunpack.c.l.b16 %v206
  %v1102 = vunpack.c.l.b16 %v207
  %v1103 = vunpack.c.l.b16 %v208
  %v1104 = vunpack.c.l.b16 %v209
  %v1105 = vunpack.c.l.b16 %v210
  %v1106 = vunpack.c.l.b16 %v211
  %v1107 = vunpack.c.l.b16 %v212
  %v1108 = vunpack.c.l.b16 %v213
  %v1109 = vunpack.c.l.b16 %v214
  %v1110 = vunpack.c.l.b16 %v215
  %v1111 = vunpack.c.l.b16 %v216
  %v1112 = vunpack.c.l.b16 %v217
  %v1113 = vunpack.c.l.b16 %v218
  %v1114 = vunpack.c.l.b16 %v219
  %v1115 = vunpack.c.l.b16 %v220
  %v1116 = vunpack.c.l.b16 %v221
  %v1117 = vunpack.c.l.b16 %v222
  %v1118 = vunpack.c.l.b16 %v223
  %v1119 = vunpack.c.l.b16 %v224
  %v1120 = vunpack.c.l.b16 %v225
  %v1121 = vunpack.c.l.b16 %v226
  %v1122 = vunpack.c.l.b16 %v227
  %v1123 = vunpack.c.l.b16 %v228
  %v1124 = vunpack.c.l.b16 %v229
  %v1125 = vunpack.c.l.b16 %v230
  %v1126 = vunpack.c.l.b16 %v231
  %v1127 = vunpack.c.l.b16 %v232
  %v1128 = vunpack.c.l.b16 %v233
  %v1129 = vunpack.c.l.b16 %v234
  %v1130 = vunpack.c.l.b16 %v235
  %v1131 = vunpack.c.l.b16 %v236
  %v1132 = vunpack.c.l.b16 %v237
  %v1133 = vunpack.c.l.b16 %v238
  %v1134 = vunpack.c.l.b16 %v239
  %v1135 = vunpack.c.l.b16 %v240
  %v1136 = vunpack.c.l.b16 %v241
  %v1137 = vunpack.c.l.b16 %v242
  %v1138 = vunpack.c.l.b16 %v243
  %v1139 = vunpack.c.l.b16 %v244
  %v1140 = vunpack.c.l.b16 %v245
  %v1141 = vunpack.c.l.b16 %v246
  %v1142 = vunpack.c.l.b16 %v247
  %v1143 = vunpack.c.l.b16 %v248
  %v1144 = vunpack.c.l.b16 %v249
  %v1145 = vunpack.c.l.b16 %v250
  %v1146 = vunpack.c.l.b16 %v251
  %v1147 = vunpack.c.l.b16 %v252
  %v1148 = vunpack.c.l.b16 %v253
  %v1149 = vunpack.c.l.b16 %v254
  %v1150 = vunpack.c.l.b16 %v255
  %v1151 = vunpack.c.l.b16 %v256
  %v1152 = vunpack.c.l.b16 %v257
  %v1153 = vunpack.c.l.b16 %v258
  %v1154 = vunpack.c.l.b16 %v259
  %v1155 = vunpack.c.l.b16 %v260
  %v1156 = vunpack.c.l.b16 %v261
  %v1157 = vunpack.c.l.b16 %v262
  %v1158 = vunpack.c.l.b16 %v263
  %v1159 = vunpack.c.l.b16 %v264
  %v1160 = vunpack.c.l.b16 %v265
  %v1161 = vunpack.c.l.b16 %v266
  %v1162 = vunpack.c.l.b16 %v267
  %v1163 = vunpack.c.l.b16 %v268
  %v1164 = vunpack.c.l.b16 %v269
  %v1165 = vunpack.c.l.b16 %v270
  %v1166 = vunpack.c.l.b16 %v271
  %v1167 = vunpack.c.l.b16 %v272
  %v1168 = vunpack.c.l.b16 %v273
  %v1169 = vunpack.c.l.b16 %v274
  %v1170 = vunpack.c.l.b16 %v275
  %v1171 = vunpack.c.l.b16 %v276
  %v1172 = vunpack.c.l.b16 %v277
  %v1173 = vunpack.c.l.b16 %v278
  %v1174 = vunpack.c.l.b16 %v279
  %v1175 = vunpack.c.l.b16 %v280
  %v1176 = vunpack.c.l.b16 %v281
  %v1177 = vunpack.c.l.b16 %v282
  %v1178 = vunpack.c.l.b16 %v283
  %v1179 = vunpack.c.l.b16 %v284
  %v1180 = vunpack.c.l.b16 %v285
  %v1181 = vunpack.c.l.b16 %v286
  %v1182 = vunpack.c.l.b16 %v287
  %v1183 = vunpack.c.l.b16 %v288
  %v1184 = vunpack.c.l.b16 %v289
  %v1185 = vunpack.c.l.b16 %v290
  %v1186 = vunpack.c.l.b16 %v291
  %v1187 = vunpack.c.l.b16 %v292
  %v1188 = vunpack.c.l.b16 %v293
  %v1189 = vunpack.c.l.b16 %v294
  %v1190 = vunpack.c.l.b16 %v295
  %v1191 = vunpack.c.l.b16 %v296
  %v1192 = vunpack.c.l.b16 %v297
  %v1193 = vunpack.c.l.b16 %v298
  %v1194 = vunpack.c.l.b16 %v299
  %v1195 = vunpack.c.l.b16 %v300
  %v1196 = vunpack.c.l.b16 %v301
  %v1197 = vunpack.c.l.b16 %v302
  %v1198 = vunpack.c.l.b16 %v303
  %v1199 = vunpack.c.l.b16 %v304
  %v1200 = vunpack.c.l.b16 %v305
  %v1201 = vunpack.c.l.b16 %v306
  %v1202 = vunpack.c.l.b16 %v307
  %v1203 = vunpack.c.l.b16 %v308
  %v1204 = vunpack.c.l.b16 %v309
  %v1205 = vunpack.c.l.b16 %v310
  %v1206 = vunpack.c.l.b16 %v311
  %v1207 = vunpack.c.l.b16 %v312
  %v1208 = vunpack.c.l.b16 %v313
  %v1209 = vunpack.c.l.b16 %v314
  %v1210 = vunpack.c.l.b16 %v315
  %v1211 = vunpack.c.l.b16 %v316
  %v1212 = vunpack.c.l.b16 %v317
  %v1213 = vunpack.c.l.b16 %v318
  %v1214 = vunpack.c.l.b16 %v319
  %v1215 = vunpack.c.l.b16 %v320
  %v1216 = vunpack.c.l.b16 %v321
  %v1217 = vunpack.c.l.b16 %v322
  %v1218 = vunpack.c.l.b16 %v323
  %v1219 = vunpack.c.l.b16 %v324
  %v1220 = vunpack.c.l.b16 %v325
  %v1221 = vunpack.c.l.b16 %v326
  %v1222 = vunpack.c.l.b16 %v327
  %v1223 = vunpack.c.l.b16 %v328
  %v1224 = vunpack.c.l.b16 %v329
  %v1225 = vunpack.c.l.b16 %v330
  %v1226 = vunpack.c.l.b16 %v331
  %v1227 = vunpack.c.l.b16 %v332
  %v1228 = vunpack.c.l.b16 %v333
  %v1229 = vunpack.c.l.b16 %v334
  %v1230 = vunpack.c.l.b16 %v335
  %v1231 = vunpack.c.l.b16 %v336
  %v1232 = vunpack.c.l.b16 %v337
  %v1233 = vunpack.c.l.b16 %v338
  %v1234 = vunpack.c.l.b16 %v339
  %v1235 = vunpack.c.l.b16 %v340
  %v1236 = vunpack.c.l.b16 %v341
  %v1237 = vunpack.c.l.b16 %v342
  %v1238 = vunpack.c.l.b16 %v343
  %v1239 = vunpack.c.l.b16 %v344
  %v1240 = vunpack.c.l.b16 %v345
  %v1241 = vunpack.c.l.b16 %v346
  %v1242 = vunpack.c.l.b16 %v347
  %v1243 = vunpack.c.l.b16 %v348
  %v1244 = vunpack.c.l.b16 %v349
  %v1245 = vunpack.c.l.b16 %v350
  %v1246 = vunpack.c.l.b16 %v351
  %v1247 = vunpack.c.l.b16 %v352
  %v1248 = vunpack.c.l.b16 %v353
  %v1249 = vunpack.c.l.b16 %v354
  %v1250 = vunpack.c.l.b16 %v355
  %v1251 = vunpack.c.l.b16 %v356
  %v1252 = vunpack.c.l.b16 %v357
  %v1253 = vunpack.c.l.b16 %v358
  %v1254 = vunpack.c.l.b16 %v359
  %v1255 = vunpack.c.l.b16 %v360
  %v1256 = vunpack.c.l.b16 %v361
  %v1257 = vunpack.c.l.b16 %v362
  %v1258 = vunpack.c.l.b16 %v363
  %v1259 = vunpack.c.l.b16 %v364
  %v1260 = vunpack.c.l.b16 %v365
  %v1261 = vunpack.c.l.b16 %v366
  %v1262 = vunpack.c.l.b16 %v367
  %v1263 = vunpack.c.l.b16 %v368
  %v1264 = vunpack.c.l.b16 %v369
  %v1265 = vunpack.c.l.b16 %v370
  %v1266 = vunpack.c.l.b16 %v371
  %v1267 = vunpack.c.l.b16 %v372
  %v1268 = vunpack.c.l.b16 %v373
  %v1269 = vunpack.c.l.b16 %v374
  %v1270 = vunpack.c.l.b16 %v375
  %v1271 = vunpack.c.l.b16 %v376
  %v1272 = vunpack.c.l.b16 %v377
  %v1273 = vunpack.c.l.b16 %v378
  %v1274 = vunpack.c.l.b16 %v379
  %v1275 = vunpack.c.l.b16 %v380
  %v1276 = vunpack.c.l.b16 %v381
  %v1277 = vunpack.c.l.b16 %v382
  %v1278 = vunpack.c.l.b16 %v383
  %v1279 = vunpack.c.l.b16 %v384
  %v1280 = vunpack.c.l.b16 %v385
  %v1281 = vunpack.c.l.b16 %v386
  %v1282 = vunpack.c.l.b16 %v387
  %v1283 = vunpack.c.l.b16 %v388
  %v1284 = vunpack.c.l.b16 %v389
  %v1285 = vunpack.c.l.b16 %v390
  %v1286 = vunpack.c.l.b16 %v391
  %v1287 = vunpack.c.l.b16 %v392
  %v1288 = vunpack.c.l.b16 %v393
  %v1289 = vunpack.c.l.b16 %v394
  %v1290 = vunpack.c.l.b16 %v395
  %v1291 = vunpack.c.l.b16 %v396
  %v1292 = vunpack.c.l.b16 %v397
  %v1293 = vunpack.c.l.b16 %v398
  %v1294 = vunpack.c.l.b16 %v399
  %v1295 = vunpack.c.l.b16 %v400
  %v1296 = vunpack.c.l.b16 %v401
  %v1297 = vunpack.c.l.b16 %v402
  %v1298 = vunpack.c.l.b16 %v403
  %v1299 = vunpack.c.l.b16 %v404
  %v1300 = vunpack.c.l.b16 %v405
  %v1301 = vunpack.c.l.b16 %v406
  %v1302 = vunpack.c.l.b16 %v407
  %v1303 = vunpack.c.l.b16 %v408
  %v1304 = vunpack.c.l.b16 %v409
  %v1305 = vunpack.c.l.b16 %v410
  %v1306 = vunpack.c.l.b16 %v411
  %v1307 = vunpack.c.l.b16 %v412
  %v1308 = vunpack.c.l.b16 %v413
  %v1309 = vunpack.c.l.b16 %v414
  %v1310 = vunpack.c.l.b16 %v415
  %v1311 = vunpack.c.l.b16 %v416
  %v1312 = vunpack.c.l.b16 %v417
  %v1313 = vunpack.c.l.b16 %v418
  %v1314 = vunpack.c.l.b16 %v419
  %v1315 = vunpack.c.l.b16 %v420
  %v1316 = vunpack.c.l.b16 %v421
  %v1317 = vunpack.c.l.b16 %v422
  %v1318 = vunpack.c.l.b16 %v423
  %v1319 = vunpack.c.l.b16 %v424
  %v1320 = vunpack.c.l.b16 %v425
  %v1321 = vunpack.c.l.b16 %v426
  %v1322 = vunpack.c.l.b16 %v427
  %v1323 = vunpack.c.l.b16 %v428
  %v1324 = vunpack.c.l.b16 %v429
  %v1325 = vunpack.c.l.b16 %v430
  %v1326 = vunpack.c.l.b16 %v431
  %v1327 = vunpack.c.l.b16 %v432
  %v1328 = vunpack.c.l.b16 %v433
  %v1329 = vunpack.c.l.b16 %v434
  %v1330 = vpack.c.b16 %v947, %v946
  %v1331 = vpack.c.b16 %v949, %v948
  %v1332 = vpack.c.b16 %v951, %v950
  %v1333 = vpack.c.b16 %v953, %v952
  %v1334 = vpack.c.b16 %v955, %v954
  %v1335 = vpack.c.b16 %v957, %v956
  %v1336 = vpack.c.b16 %v959, %v958
  %v1337 = vpack.c.b16 %v961, %v960
  %v1338 = vpack.c.b16 %v963, %v962
  %v1339 = vpack.c.b16 %v965, %v964
  %v1340 = vpack.c.b16 %v967, %v966
  %v1341 = vpack.c.b16 %v969, %v968
  %v1342 = vpack.c.b16 %v971, %v970
  %v1343 = vpack.c.b16 %v973, %v972
  %v1344 = vpack.c.b16 %v975, %v974
  %v1345 = vpack.c.b16 %v977, %v976
  %v1346 = vpack.c.b16 %v979, %v978
  %v1347 = vpack.c.b16 %v981, %v980
  %v1348 = vpack.c.b16 %v983, %v982
  %v1349 = vpack.c.b16 %v985, %v984
  %v1350 = vpack.c.b16 %v987, %v986
  %v1351 = vpack.c.b16 %v989, %v988
  %v1352 = vpack.c.b16 %v991, %v990
  %v1353 = vpack.c.b16 %v993, %v992
  %v1354 = vpack.c.b16 %v995, %v994
  %v1355 = vpack.c.b16 %v997, %v996
  %v1356 = vpack.c.b16 %v999, %v998
  %v1357 = vpack.c.b16 %v1001, %v1000
  %v1358 = vpack.c.b16 %v1003, %v1002
  %v1359 = vpack.c.b16 %v1005, %v1004
  %v1360 = vpack.c.b16 %v1007, %v1006
  %v1361 = vpack.c.b16 %v1009, %v1008
  %v1362 = vpack.c.b16 %v1011, %v1010
  %v1363 = vpack.c.b16 %v1013, %v1012
  %v1364 = vpack.c.b16 %v1015, %v1014
  %v1365 = vpack.c.b16 %v1017, %v1016
  %v1366 = vpack.c.b16 %v1019, %v1018
  %v1367 = vpack.c.b16 %v1021, %v1020
  %v1368 = vpack.c.b16 %v1023, %v1022
  %v1369 = vpack.c.b16 %v1025, %v1024
  %v1370 = vpack.c.b16 %v1027, %v1026
  %v1371 = vpack.c.b16 %v1029, %v1028
  %v1372 = vpack.c.b16 %v1031, %v1030
  %v1373 = vpack.c.b16 %v1033, %v1032
  %v1374 = vpack.c.b16 %v1035, %v1034
  %v1375 = vpack.c.b16 %v1037, %v1036
  %v1376 = vpack.c.b16 %v1039, %v1038
  %v1377 = vpack.c.b16 %v1041, %v1040
  %v1378 = vpack.c.b16 %v1043, %v1042
  %v1379 = vpack.c.b16 %v1045, %v1044
  %v1380 = vpack.c.b16 %v1047, %v1046
  %v1381 = vpack.c.b16 %v1049, %v1048
  %v1382 = vpack.c.b16 %v1051, %v1050
  %v1383 = vpack.c.b16 %v1053, %v1052
  %v1384 = vpack.c.b16 %v1055, %v1054
  %v1385 = vpack.c.b16 %v1057, %v1056
  %v1386 = vpack.c.b16 %v1059, %v1058
  %v1387 = vpack.c.b16 %v1061, %v1060
  %v1388 = vpack.c.b16 %v1063, %v1062
  %v1389 = vpack.c.b16 %v1065, %v1064
  %v1390 = vpack.c.b16 %v1067, %v1066
  %v1391 = vpack.c.b16 %v1069, %v1068
  %v1392 = vpack.c.b16 %v1071, %v1070
  %v1393 = vpack.c.b16 %v1073, %v1072
  %v1394 = vpack.c.b16 %v1075, %v1074
  %v1395 = vpack.c.b16 %v1077, %v1076
  %v1396 = vpack.c.b16 %v1079, %v1078
  %v1397 = vpack.c.b16 %v1081, %v1080
  %v1398 = vpack.c.b16 %v1083, %v1082
  %v1399 = vpack.c.b16 %v1085, %v1084
  %v1400 = vpack.c.b16 %v1087, %v1086
  %v1401 = vpack.c.b16 %v1089, %v1088
  %v1402 = vpack.c.b16 %v1091, %v1090
  %v1403 = vpack.c.b16 %v1093, %v1092
  %v1404 = vpack.c.b16 %v1095, %v1094
  %v1405 = vpack.c.b16 %v1097, %v1096
  %v1406 = vpack.c.b16 %v1099, %v1098
  %v1407 = vpack.c.b16 %v1101, %v1100
  %v1408 = vpack.c.b16 %v1103, %v1102
  %v1409 = vpack.c.b16 %v1105, %v1104
  %v1410 = vpack.c.b16 %v1107, %v1106
  %v1411 = vpack.c.b16 %v1109, %v1108
  %v1412 = vpack.c.b16 %v1111, %v1110
  %v1413 = vpack.c.b16 %v1113, %v1112
  %v1414 = vpack.c.b16 %v1115, %v1114
  %v1415 = vpack.c.b16 %v1117, %v1116
  %v1416 = vpack.c.b16 %v1119, %v1118
  %v1417 = vpack.c.b16 %v1121, %v1120
  %v1418 = vpack.c.b16 %v1123, %v1122
  %v1419 = vpack.c.b16 %v1125, %v1124
  %v1420 = vpack.c.b16 %v1127, %v1126
  %v1421 = vpack.c.b16 %v1129, %v1128
  %v1422 = vpack.c.b16 %v1131, %v1130
  %v1423 = vpack.c.b16 %v1133, %v1132
  %v1424 = vpack.c.b16 %v1135, %v1134
  %v1425 = vpack.c.b16 %v1137, %v1136
  %v1426 = vpack.c.b16 %v1139, %v1138
  %v1427 = vpack.c.b16 %v1141, %v1140
  %v1428 = vpack.c.b16 %v1143, %v1142
  %v1429 = vpack.c.b16 %v1145, %v1144
  %v1430 = vpack.c.b16 %v1147, %v1146
  %v1431 = vpack.c.b16 %v1149, %v1148
  %v1432 = vpack.c.b16 %v1151, %v1150
  %v1433 = vpack.c.b16 %v1153, %v1152
  %v1434 = vpack.c.b16 %v1155, %v1154
  %v1435 = vpack.c.b16 %v1157, %v1156
  %v1436 = vpack.c.b16 %v1159, %v1158
  %v1437 = vpack.c.b16 %v1161, %v1160
  %v1438 = vpack.c.b16 %v1163, %v1162
  %v1439 = vpack.c.b16 %v1165, %v1164
  %v1440 = vpack.c.b16 %v1167, %v1166
  %v1441 = vpack.c.b16 %v1169, %v1168
  %v1442 = vpack.c.b16 %v1171, %v1170
  %v1443 = vpack.c.b16 %v1173, %v1172
  %v1444 = vpack.c.b16 %v1175, %v1174
  %v1445 = vpack.c.b16 %v1177, %v1176
  %v1446 = vpack.c.b16 %v1179, %v1178
  %v1447 = vpack.c.b16 %v1181, %v1180
  %v1448 = vpack.c.b16 %v1183, %v1182
  %v1449 = vpack.c.b16 %v1185, %v1184
  %v1450 = vpack.c.b16 %v1187, %v1186
  %v1451 = vpack.c.b16 %v1189, %v1188
  %v1452 = vpack.c.b16 %v1191, %v1190
  %v1453 = vpack.c.b16 %v1193, %v1192
  %v1454 = vpack.c.b16 %v1195, %v1194
  %v1455 = vpack.c.b16 %v1197, %v1196
  %v1456 = vpack.c.b16 %v1199, %v1198
  %v1457 = vpack.c.b16 %v1201, %v1200
  %v1458 = vpack.c.b16 %v1203, %v1202
  %v1459 = vpack.c.b16 %v1205, %v1204
  %v1460 = vpack.c.b16 %v1207, %v1206
  %v1461 = vpack.c.b16 %v1209, %v1208
  %v1462 = vpack.c.b16 %v1211, %v1210
  %v1463 = vpack.c.b16 %v1213, %v1212
  %v1464 = vpack.c.b16 %v1215, %v1214
  %v1465 = vpack.c.b16 %v1217, %v1216
  %v1466 = vpack.c.b16 %v1219, %v1218
  %v1467 = vpack.c.b16 %v1221, %v1220
  %v1468 = vpack.c.b16 %v1223, %v1222
  %v1469 = vpack.c.b16 %v1225, %v1224
  %v1470 = vpack.c.b16 %v1227, %v1226
  %v1471 = vpack.c.b16 %v1229, %v1228
  %v1472 = vpack.c.b16 %v1231, %v1230
  %v1473 = vpack.c.b16 %v1233, %v1232
  %v1474 = vpack.c.b16 %v1235, %v1234
  %v1475 = vpack.c.b16 %v1237, %v1236
  %v1476 = vpack.c.b16 %v1239, %v1238
  %v1477 = vpack.c.b16 %v1241, %v1240
  %v1478 = vpack.c.b16 %v1243, %v1242
  %v1479 = vpack.c.b16 %v1245, %v1244
  %v1480 = vpack.c.b16 %v1247, %v1246
  %v1481 = vpack.c.b16 %v1249, %v1248
  %v1482 = vpack.c.b16 %v1251, %v1250
  %v1483 = vpack.c.b16 %v1253, %v1252
  %v1484 = vpack.c.b16 %v1255, %v1254
  %v1485 = vpack.c.b16 %v1257, %v1256
  %v1486 = vpack.c.b16 %v1259, %v1258
  %v1487 = vpack.c.b16 %v1261, %v1260
  %v1488 = vpack.c.b16 %v1263, %v1262
  %v1489 = vpack.c.b16 %v1265, %v1264
  %v1490 = vpack.c.b16 %v1267, %v1266
  %v1491 = vpack.c.b16 %v1269, %v1268
  %v1492 = vpack.c.b16 %v1271, %v1270
  %v1493 = vpack.c.b16 %v1273, %v1272
  %v1494 = vpack.c.b16 %v1275, %v1274
  %v1495 = vpack.c.b16 %v1277, %v1276
  %v1496 = vpack.c.b16 %v1279, %v1278
  %v1497 = vpack.c.b16 %v1281, %v1280
  %v1498 = vpack.c.b16 %v1283, %v1282
  %v1499 = vpack.c.b16 %v1285, %v1284
  %v1500 = vpack.c.b16 %v1287, %v1286
  %v1501 = vpack.c.b16 %v1289, %v1288
  %v1502 = vpack.c.b16 %v1291, %v1290
  %v1503 = vpack.c.b16 %v1293, %v1292
  %v1504 = vpack.c.b16 %v1295, %v1294
  %v1505 = vpack.c.b16 %v1297, %v1296
  %v1506 = vpack.c.b16 %v1299, %v1298
  %v1507 = vpack.c.b16 %v1301, %v1300
  %v1508 = vpack.c.b16 %v1303, %v1302
  %v1509 = vpack.c.b16 %v1305, %v1304
  %v1510 = vpack.c.b16 %v1307, %v1306
  %v1511 = vpack.c.b16 %v1309, %v1308
  %v1512 = vpack.c.b16 %v1311, %v1310
  %v1513 = vpack.c.b16 %v1313, %v1312
  %v1514 = vpack.c.b16 %v1315, %v1314
  %v1515 = vpack.c.b16 %v1317, %v1316
  %v1516 = vpack.c.b16 %v1319, %v1318
  %v1517 = vpack.c.b16 %v1321, %v1320
  %v1518 = vpack.c.b16 %v1323, %v1322
  %v1519 = vpack.c.b16 %v1325, %v1324
  %v1520 = vpack.c.b16 %v1327, %v1326
  %v1521 = vpack.c.b16 %v1329, %v1328
  %1714 = vmatprep.subr.bf16.mxu0 0
  %1715 = vmatpush1.bf16.msra.mxu0 %v1330
  %1716 = vmatprep.subr.bf16.mxu0 0
  %1717 = vmatpush1.bf16.msra.mxu0 %v1331
  %1718 = vmatprep.subr.bf16.mxu0 0
  %1719 = vmatpush1.bf16.msra.mxu0 %v1332
  %1720 = vmatprep.subr.bf16.mxu0 0
  %1721 = vmatpush1.bf16.msra.mxu0 %v1333
  %1722 = vmatprep.subr.bf16.mxu0 0
  %1723 = vmatpush1.bf16.msra.mxu0 %v1334
  %1724 = vmatprep.subr.bf16.mxu0 0
  %1725 = vmatpush1.bf16.msra.mxu0 %v1335
  %1726 = vmatprep.subr.bf16.mxu0 0
  %1727 = vmatpush1.bf16.msra.mxu0 %v1336
  %1728 = vmatprep.subr.bf16.mxu0 0
  %1729 = vmatpush1.bf16.msra.mxu0 %v1337
  %1730 = vmatprep.subr.bf16.mxu0 0
  %1731 = vmatpush1.bf16.msra.mxu0 %v1338
  %1732 = vmatprep.subr.bf16.mxu0 0
  %1733 = vmatpush1.bf16.msra.mxu0 %v1339
  %1734 = vmatprep.subr.bf16.mxu0 0
  %1735 = vmatpush1.bf16.msra.mxu0 %v1340
  %1736 = vmatprep.subr.bf16.mxu0 0
  %1737 = vmatpush1.bf16.msra.mxu0 %v1341
  %1738 = vmatprep.subr.bf16.mxu0 0
  %1739 = vmatpush1.bf16.msra.mxu0 %v1342
  %1740 = vmatprep.subr.bf16.mxu0 0
  %1741 = vmatpush1.bf16.msra.mxu0 %v1343
  %1742 = vmatprep.subr.bf16.mxu0 0
  %1743 = vmatpush1.bf16.msra.mxu0 %v1344
  %1744 = vmatprep.subr.bf16.mxu0 0
  %1745 = vmatpush1.bf16.msra.mxu0 %v1345
  %1746 = vmatprep.mubr.bf16.mxu0 %v515
  %1747 = vmatmul.mubr.bf16.gmra.mrb[0].mxu0 %v514
  %v1748 = vpop.f32.mrb[0].mxu0
  %v1749 = vadd.f32 %v440, %v1748
  %v1750 = vpop.f32.mrb[0].mxu0
  %v1751 = vpop.f32.mrb[0].mxu0
  %v1752 = vadd.f32 %v440, %v1751
  %v1753 = vpop.f32.mrb[0].mxu0
  %1754 = vdwg.mxu0
  %1755 = vmatprep.subr.bf16.mxu0 0
  %1756 = vmatpush1.bf16.msra.mxu0 %v1346
  %1757 = vmatprep.subr.bf16.mxu0 0
  %1758 = vmatpush1.bf16.msra.mxu0 %v1347
  %1759 = vmatprep.subr.bf16.mxu0 0
  %1760 = vmatpush1.bf16.msra.mxu0 %v1348
  %1761 = vmatprep.subr.bf16.mxu0 0
  %1762 = vmatpush1.bf16.msra.mxu0 %v1349
  %1763 = vmatprep.subr.bf16.mxu0 0
  %1764 = vmatpush1.bf16.msra.mxu0 %v1350
  %1765 = vmatprep.subr.bf16.mxu0 0
  %1766 = vmatpush1.bf16.msra.mxu0 %v1351
  %1767 = vmatprep.subr.bf16.mxu0 0
  %1768 = vmatpush1.bf16.msra.mxu0 %v1352
  %1769 = vmatprep.subr.bf16.mxu0 0
  %1770 = vmatpush1.bf16.msra.mxu0 %v1353
  %1771 = vmatprep.subr.bf16.mxu0 0
  %1772 = vmatpush1.bf16.msra.mxu0 %v1354
  %1773 = vmatprep.subr.bf16.mxu0 0
  %1774 = vmatpush1.bf16.msra.mxu0 %v1355
  %1775 = vmatprep.subr.bf16.mxu0 0
  %1776 = vmatpush1.bf16.msra.mxu0 %v1356
  %1777 = vmatprep.subr.bf16.mxu0 0
  %1778 = vmatpush1.bf16.msra.mxu0 %v1357
  %1779 = vmatprep.subr.bf16.mxu0 0
  %1780 = vmatpush1.bf16.msra.mxu0 %v1358
  %1781 = vmatprep.subr.bf16.mxu0 0
  %1782 = vmatpush1.bf16.msra.mxu0 %v1359
  %1783 = vmatprep.subr.bf16.mxu0 0
  %1784 = vmatpush1.bf16.msra.mxu0 %v1360
  %1785 = vmatprep.subr.bf16.mxu0 0
  %1786 = vmatpush1.bf16.msra.mxu0 %v1361
  %1787 = vmatprep.mubr.bf16.mxu0 %v517
  %1788 = vmatmul.mubr.bf16.gmra.mrb[0].mxu0 %v516
  %v1789 = vpop.f32.mrb[0].mxu0
  %v1790 = vadd.f32 %v1749, %v1789
  %v1791 = vpop.f32.mrb[0].mxu0
  %v1792 = vpop.f32.mrb[0].mxu0
  %v1793 = vadd.f32 %v1752, %v1792
  %v1794 = vpop.f32.mrb[0].mxu0
  %1795 = vdwg.mxu0
  %1796 = vmatprep.subr.bf16.mxu0 0
  %1797 = vmatpush1.bf16.msra.mxu0 %v1362
  %1798 = vmatprep.subr.bf16.mxu0 0
  %1799 = vmatpush1.bf16.msra.mxu0 %v1363
  %1800 = vmatprep.subr.bf16.mxu0 0
  %1801 = vmatpush1.bf16.msra.mxu0 %v1364
  %1802 = vmatprep.subr.bf16.mxu0 0
  %1803 = vmatpush1.bf16.msra.mxu0 %v1365
  %1804 = vmatprep.subr.bf16.mxu0 0
  %1805 = vmatpush1.bf16.msra.mxu0 %v1366
  %1806 = vmatprep.subr.bf16.mxu0 0
  %1807 = vmatpush1.bf16.msra.mxu0 %v1367
  %1808 = vmatprep.subr.bf16.mxu0 0
  %1809 = vmatpush1.bf16.msra.mxu0 %v1368
  %1810 = vmatprep.subr.bf16.mxu0 0
  %1811 = vmatpush1.bf16.msra.mxu0 %v1369
  %1812 = vmatprep.subr.bf16.mxu0 0
  %1813 = vmatpush1.bf16.msra.mxu0 %v1370
  %1814 = vmatprep.subr.bf16.mxu0 0
  %1815 = vmatpush1.bf16.msra.mxu0 %v1371
  %1816 = vmatprep.subr.bf16.mxu0 0
  %1817 = vmatpush1.bf16.msra.mxu0 %v1372
  %1818 = vmatprep.subr.bf16.mxu0 0
  %1819 = vmatpush1.bf16.msra.mxu0 %v1373
  %1820 = vmatprep.subr.bf16.mxu0 0
  %1821 = vmatpush1.bf16.msra.mxu0 %v1374
  %1822 = vmatprep.subr.bf16.mxu0 0
  %1823 = vmatpush1.bf16.msra.mxu0 %v1375
  %1824 = vmatprep.subr.bf16.mxu0 0
  %1825 = vmatpush1.bf16.msra.mxu0 %v1376
  %1826 = vmatprep.subr.bf16.mxu0 0
  %1827 = vmatpush1.bf16.msra.mxu0 %v1377
  %1828 = vmatprep.mubr.bf16.mxu0 %v519
  %1829 = vmatmul.mubr.bf16.gmra.mrb[0].mxu0 %v518
  %v1830 = vpop.f32.mrb[0].mxu0
  %v1831 = vadd.f32 %v1790, %v1830
  %v1832 = vpop.f32.mrb[0].mxu0
  %v1833 = vpop.f32.mrb[0].mxu0
  %v1834 = vadd.f32 %v1793, %v1833
  %v1835 = vpop.f32.mrb[0].mxu0
  %1836 = vdwg.mxu0
  %1837 = vmatprep.subr.bf16.mxu0 0
  %1838 = vmatpush1.bf16.msra.mxu0 %v1378
  %1839 = vmatprep.subr.bf16.mxu0 0
  %1840 = vmatpush1.bf16.msra.mxu0 %v1379
  %1841 = vmatprep.subr.bf16.mxu0 0
  %1842 = vmatpush1.bf16.msra.mxu0 %v1380
  %1843 = vmatprep.subr.bf16.mxu0 0
  %1844 = vmatpush1.bf16.msra.mxu0 %v1381
  %1845 = vmatprep.subr.bf16.mxu0 0
  %1846 = vmatpush1.bf16.msra.mxu0 %v1382
  %1847 = vmatprep.subr.bf16.mxu0 0
  %1848 = vmatpush1.bf16.msra.mxu0 %v1383
  %1849 = vmatprep.subr.bf16.mxu0 0
  %1850 = vmatpush1.bf16.msra.mxu0 %v1384
  %1851 = vmatprep.subr.bf16.mxu0 0
  %1852 = vmatpush1.bf16.msra.mxu0 %v1385
  %1853 = vmatprep.subr.bf16.mxu0 0
  %1854 = vmatpush1.bf16.msra.mxu0 %v1386
  %1855 = vmatprep.subr.bf16.mxu0 0
  %1856 = vmatpush1.bf16.msra.mxu0 %v1387
  %1857 = vmatprep.subr.bf16.mxu0 0
  %1858 = vmatpush1.bf16.msra.mxu0 %v1388
  %1859 = vmatprep.subr.bf16.mxu0 0
  %1860 = vmatpush1.bf16.msra.mxu0 %v1389
  %1861 = vmatprep.subr.bf16.mxu0 0
  %1862 = vmatpush1.bf16.msra.mxu0 %v1390
  %1863 = vmatprep.subr.bf16.mxu0 0
  %1864 = vmatpush1.bf16.msra.mxu0 %v1391
  %1865 = vmatprep.subr.bf16.mxu0 0
  %1866 = vmatpush1.bf16.msra.mxu0 %v1392
  %1867 = vmatprep.subr.bf16.mxu0 0
  %1868 = vmatpush1.bf16.msra.mxu0 %v1393
  %1869 = vmatprep.mubr.bf16.mxu0 %v521
  %1870 = vmatmul.mubr.bf16.gmra.mrb[0].mxu0 %v520
  %v1871 = vpop.f32.mrb[0].mxu0
  %v1872 = vadd.f32 %v1831, %v1871
  %v1873 = vpop.f32.mrb[0].mxu0
  %v1874 = vpop.f32.mrb[0].mxu0
  %v1875 = vadd.f32 %v1834, %v1874
  %v1876 = vpop.f32.mrb[0].mxu0
  %1877 = vdwg.mxu0
  %1878 = vmatprep.subr.bf16.mxu0 0
  %1879 = vmatpush1.bf16.msra.mxu0 %v1394
  %1880 = vmatprep.subr.bf16.mxu0 0
  %1881 = vmatpush1.bf16.msra.mxu0 %v1395
  %1882 = vmatprep.subr.bf16.mxu0 0
  %1883 = vmatpush1.bf16.msra.mxu0 %v1396
  %1884 = vmatprep.subr.bf16.mxu0 0
  %1885 = vmatpush1.bf16.msra.mxu0 %v1397
  %1886 = vmatprep.subr.bf16.mxu0 0
  %1887 = vmatpush1.bf16.msra.mxu0 %v1398
  %1888 = vmatprep.subr.bf16.mxu0 0
  %1889 = vmatpush1.bf16.msra.mxu0 %v1399
  %1890 = vmatprep.subr.bf16.mxu0 0
  %1891 = vmatpush1.bf16.msra.mxu0 %v1400
  %1892 = vmatprep.subr.bf16.mxu0 0
  %1893 = vmatpush1.bf16.msra.mxu0 %v1401
  %1894 = vmatprep.subr.bf16.mxu0 0
  %1895 = vmatpush1.bf16.msra.mxu0 %v1402
  %1896 = vmatprep.subr.bf16.mxu0 0
  %1897 = vmatpush1.bf16.msra.mxu0 %v1403
  %1898 = vmatprep.subr.bf16.mxu0 0
  %1899 = vmatpush1.bf16.msra.mxu0 %v1404
  %1900 = vmatprep.subr.bf16.mxu0 0
  %1901 = vmatpush1.bf16.msra.mxu0 %v1405
  %1902 = vmatprep.subr.bf16.mxu0 0
  %1903 = vmatpush1.bf16.msra.mxu0 %v1406
  %1904 = vmatprep.subr.bf16.mxu0 0
  %1905 = vmatpush1.bf16.msra.mxu0 %v1407
  %1906 = vmatprep.subr.bf16.mxu0 0
  %1907 = vmatpush1.bf16.msra.mxu0 %v1408
  %1908 = vmatprep.subr.bf16.mxu0 0
  %1909 = vmatpush1.bf16.msra.mxu0 %v1409
  %1910 = vmatprep.mubr.bf16.mxu0 %v523
  %1911 = vmatmul.mubr.bf16.gmra.mrb[0].mxu0 %v522
  %v1912 = vpop.f32.mrb[0].mxu0
  %v1913 = vadd.f32 %v1872, %v1912
  %v1914 = vpop.f32.mrb[0].mxu0
  %v1915 = vpop.f32.mrb[0].mxu0
  %v1916 = vadd.f32 %v1875, %v1915
  %v1917 = vpop.f32.mrb[0].mxu0
  %1918 = vdwg.mxu0
  %1919 = vmatprep.subr.bf16.mxu0 0
  %1920 = vmatpush1.bf16.msra.mxu0 %v1410
  %1921 = vmatprep.subr.bf16.mxu0 0
  %1922 = vmatpush1.bf16.msra.mxu0 %v1411
  %1923 = vmatprep.subr.bf16.mxu0 0
  %1924 = vmatpush1.bf16.msra.mxu0 %v1412
  %1925 = vmatprep.subr.bf16.mxu0 0
  %1926 = vmatpush1.bf16.msra.mxu0 %v1413
  %1927 = vmatprep.subr.bf16.mxu0 0
  %1928 = vmatpush1.bf16.msra.mxu0 %v1414
  %1929 = vmatprep.subr.bf16.mxu0 0
  %1930 = vmatpush1.bf16.msra.mxu0 %v1415
  %1931 = vmatprep.subr.bf16.mxu0 0
  %1932 = vmatpush1.bf16.msra.mxu0 %v1416
  %1933 = vmatprep.subr.bf16.mxu0 0
  %1934 = vmatpush1.bf16.msra.mxu0 %v1417
  %1935 = vmatprep.subr.bf16.mxu0 0
  %1936 = vmatpush1.bf16.msra.mxu0 %v1418
  %1937 = vmatprep.subr.bf16.mxu0 0
  %1938 = vmatpush1.bf16.msra.mxu0 %v1419
  %1939 = vmatprep.subr.bf16.mxu0 0
  %1940 = vmatpush1.bf16.msra.mxu0 %v1420
  %1941 = vmatprep.subr.bf16.mxu0 0
  %1942 = vmatpush1.bf16.msra.mxu0 %v1421
  %1943 = vmatprep.subr.bf16.mxu0 0
  %1944 = vmatpush1.bf16.msra.mxu0 %v1422
  %1945 = vmatprep.subr.bf16.mxu0 0
  %1946 = vmatpush1.bf16.msra.mxu0 %v1423
  %1947 = vmatprep.subr.bf16.mxu0 0
  %1948 = vmatpush1.bf16.msra.mxu0 %v1424
  %1949 = vmatprep.subr.bf16.mxu0 0
  %1950 = vmatpush1.bf16.msra.mxu0 %v1425
  %1951 = vmatprep.mubr.bf16.mxu0 %v525
  %1952 = vmatmul.mubr.bf16.gmra.mrb[0].mxu0 %v524
  %v1953 = vpop.f32.mrb[0].mxu0
  %v1954 = vadd.f32 %v1913, %v1953
  %v1955 = vpop.f32.mrb[0].mxu0
  %v1956 = vpop.f32.mrb[0].mxu0
  %v1957 = vadd.f32 %v1916, %v1956
  %v1958 = vpop.f32.mrb[0].mxu0
  %1959 = vdwg.mxu0
  %1960 = vmatprep.subr.bf16.mxu0 0
  %1961 = vmatpush1.bf16.msra.mxu0 %v1426
  %1962 = vmatprep.subr.bf16.mxu0 0
  %1963 = vmatpush1.bf16.msra.mxu0 %v1427
  %1964 = vmatprep.subr.bf16.mxu0 0
  %1965 = vmatpush1.bf16.msra.mxu0 %v1428
  %1966 = vmatprep.subr.bf16.mxu0 0
  %1967 = vmatpush1.bf16.msra.mxu0 %v1429
  %1968 = vmatprep.subr.bf16.mxu0 0
  %1969 = vmatpush1.bf16.msra.mxu0 %v1430
  %1970 = vmatprep.subr.bf16.mxu0 0
  %1971 = vmatpush1.bf16.msra.mxu0 %v1431
  %1972 = vmatprep.subr.bf16.mxu0 0
  %1973 = vmatpush1.bf16.msra.mxu0 %v1432
  %1974 = vmatprep.subr.bf16.mxu0 0
  %1975 = vmatpush1.bf16.msra.mxu0 %v1433
  %1976 = vmatprep.subr.bf16.mxu0 0
  %1977 = vmatpush1.bf16.msra.mxu0 %v1434
  %1978 = vmatprep.subr.bf16.mxu0 0
  %1979 = vmatpush1.bf16.msra.mxu0 %v1435
  %1980 = vmatprep.subr.bf16.mxu0 0
  %1981 = vmatpush1.bf16.msra.mxu0 %v1436
  %1982 = vmatprep.subr.bf16.mxu0 0
  %1983 = vmatpush1.bf16.msra.mxu0 %v1437
  %1984 = vmatprep.subr.bf16.mxu0 0
  %1985 = vmatpush1.bf16.msra.mxu0 %v1438
  %1986 = vmatprep.subr.bf16.mxu0 0
  %1987 = vmatpush1.bf16.msra.mxu0 %v1439
  %1988 = vmatprep.subr.bf16.mxu0 0
  %1989 = vmatpush1.bf16.msra.mxu0 %v1440
  %1990 = vmatprep.subr.bf16.mxu0 0
  %1991 = vmatpush1.bf16.msra.mxu0 %v1441
  %1992 = vmatprep.mubr.bf16.mxu0 %v527
  %1993 = vmatmul.mubr.bf16.gmra.mrb[0].mxu0 %v526
  %v1994 = vpop.f32.mrb[0].mxu0
  %v1995 = vadd.f32 %v1954, %v1994
  %v1996 = vpop.f32.mrb[0].mxu0
  %v1997 = vpop.f32.mrb[0].mxu0
  %v1998 = vadd.f32 %v1957, %v1997
  %v1999 = vpop.f32.mrb[0].mxu0
  %2000 = vdwg.mxu0
  %2001 = vmatprep.subr.bf16.mxu0 0
  %2002 = vmatpush1.bf16.msra.mxu0 %v1442
  %2003 = vmatprep.subr.bf16.mxu0 0
  %2004 = vmatpush1.bf16.msra.mxu0 %v1443
  %2005 = vmatprep.subr.bf16.mxu0 0
  %2006 = vmatpush1.bf16.msra.mxu0 %v1444
  %2007 = vmatprep.subr.bf16.mxu0 0
  %2008 = vmatpush1.bf16.msra.mxu0 %v1445
  %2009 = vmatprep.subr.bf16.mxu0 0
  %2010 = vmatpush1.bf16.msra.mxu0 %v1446
  %2011 = vmatprep.subr.bf16.mxu0 0
  %2012 = vmatpush1.bf16.msra.mxu0 %v1447
  %2013 = vmatprep.subr.bf16.mxu0 0
  %2014 = vmatpush1.bf16.msra.mxu0 %v1448
  %2015 = vmatprep.subr.bf16.mxu0 0
  %2016 = vmatpush1.bf16.msra.mxu0 %v1449
  %2017 = vmatprep.subr.bf16.mxu0 0
  %2018 = vmatpush1.bf16.msra.mxu0 %v1450
  %2019 = vmatprep.subr.bf16.mxu0 0
  %2020 = vmatpush1.bf16.msra.mxu0 %v1451
  %2021 = vmatprep.subr.bf16.mxu0 0
  %2022 = vmatpush1.bf16.msra.mxu0 %v1452
  %2023 = vmatprep.subr.bf16.mxu0 0
  %2024 = vmatpush1.bf16.msra.mxu0 %v1453
  %2025 = vmatprep.subr.bf16.mxu0 0
  %2026 = vmatpush1.bf16.msra.mxu0 %v1454
  %2027 = vmatprep.subr.bf16.mxu0 0
  %2028 = vmatpush1.bf16.msra.mxu0 %v1455
  %2029 = vmatprep.subr.bf16.mxu0 0
  %2030 = vmatpush1.bf16.msra.mxu0 %v1456
  %2031 = vmatprep.subr.bf16.mxu0 0
  %2032 = vmatpush1.bf16.msra.mxu0 %v1457
  %2033 = vmatprep.mubr.bf16.mxu0 %v529
  %2034 = vmatmul.mubr.bf16.gmra.mrb[0].mxu0 %v528
  %v2035 = vpop.f32.mrb[0].mxu0
  %v2036 = vadd.f32 %v1995, %v2035
  %v2037 = vpop.f32.mrb[0].mxu0
  %v2038 = vpop.f32.mrb[0].mxu0
  %v2039 = vadd.f32 %v1998, %v2038
  %v2040 = vpop.f32.mrb[0].mxu0
  %2041 = vdwg.mxu0
  %2042 = vmatprep.subr.bf16.mxu0 0
  %2043 = vmatpush1.bf16.msra.mxu0 %v1458
  %2044 = vmatprep.subr.bf16.mxu0 0
  %2045 = vmatpush1.bf16.msra.mxu0 %v1459
  %2046 = vmatprep.subr.bf16.mxu0 0
  %2047 = vmatpush1.bf16.msra.mxu0 %v1460
  %2048 = vmatprep.subr.bf16.mxu0 0
  %2049 = vmatpush1.bf16.msra.mxu0 %v1461
  %2050 = vmatprep.subr.bf16.mxu0 0
  %2051 = vmatpush1.bf16.msra.mxu0 %v1462
  %2052 = vmatprep.subr.bf16.mxu0 0
  %2053 = vmatpush1.bf16.msra.mxu0 %v1463
  %2054 = vmatprep.subr.bf16.mxu0 0
  %2055 = vmatpush1.bf16.msra.mxu0 %v1464
  %2056 = vmatprep.subr.bf16.mxu0 0
  %2057 = vmatpush1.bf16.msra.mxu0 %v1465
  %2058 = vmatprep.subr.bf16.mxu0 0
  %2059 = vmatpush1.bf16.msra.mxu0 %v1466
  %2060 = vmatprep.subr.bf16.mxu0 0
  %2061 = vmatpush1.bf16.msra.mxu0 %v1467
  %2062 = vmatprep.subr.bf16.mxu0 0
  %2063 = vmatpush1.bf16.msra.mxu0 %v1468
  %2064 = vmatprep.subr.bf16.mxu0 0
  %2065 = vmatpush1.bf16.msra.mxu0 %v1469
  %2066 = vmatprep.subr.bf16.mxu0 0
  %2067 = vmatpush1.bf16.msra.mxu0 %v1470
  %2068 = vmatprep.subr.bf16.mxu0 0
  %2069 = vmatpush1.bf16.msra.mxu0 %v1471
  %2070 = vmatprep.subr.bf16.mxu0 0
  %2071 = vmatpush1.bf16.msra.mxu0 %v1472
  %2072 = vmatprep.subr.bf16.mxu0 0
  %2073 = vmatpush1.bf16.msra.mxu0 %v1473
  %2074 = vmatprep.mubr.bf16.mxu0 %v531
  %2075 = vmatmul.mubr.bf16.gmra.mrb[0].mxu0 %v530
  %v2076 = vpop.f32.mrb[0].mxu0
  %v2077 = vadd.f32 %v2036, %v2076
  %v2078 = vpop.f32.mrb[0].mxu0
  %v2079 = vpop.f32.mrb[0].mxu0
  %v2080 = vadd.f32 %v2039, %v2079
  %v2081 = vpop.f32.mrb[0].mxu0
  %2082 = vdwg.mxu0
  %2083 = vmatprep.subr.bf16.mxu0 0
  %2084 = vmatpush1.bf16.msra.mxu0 %v1474
  %2085 = vmatprep.subr.bf16.mxu0 0
  %2086 = vmatpush1.bf16.msra.mxu0 %v1475
  %2087 = vmatprep.subr.bf16.mxu0 0
  %2088 = vmatpush1.bf16.msra.mxu0 %v1476
  %2089 = vmatprep.subr.bf16.mxu0 0
  %2090 = vmatpush1.bf16.msra.mxu0 %v1477
  %2091 = vmatprep.subr.bf16.mxu0 0
  %2092 = vmatpush1.bf16.msra.mxu0 %v1478
  %2093 = vmatprep.subr.bf16.mxu0 0
  %2094 = vmatpush1.bf16.msra.mxu0 %v1479
  %2095 = vmatprep.subr.bf16.mxu0 0
  %2096 = vmatpush1.bf16.msra.mxu0 %v1480
  %2097 = vmatprep.subr.bf16.mxu0 0
  %2098 = vmatpush1.bf16.msra.mxu0 %v1481
  %2099 = vmatprep.subr.bf16.mxu0 0
  %2100 = vmatpush1.bf16.msra.mxu0 %v1482
  %2101 = vmatprep.subr.bf16.mxu0 0
  %2102 = vmatpush1.bf16.msra.mxu0 %v1483
  %2103 = vmatprep.subr.bf16.mxu0 0
  %2104 = vmatpush1.bf16.msra.mxu0 %v1484
  %2105 = vmatprep.subr.bf16.mxu0 0
  %2106 = vmatpush1.bf16.msra.mxu0 %v1485
  %2107 = vmatprep.subr.bf16.mxu0 0
  %2108 = vmatpush1.bf16.msra.mxu0 %v1486
  %2109 = vmatprep.subr.bf16.mxu0 0
  %2110 = vmatpush1.bf16.msra.mxu0 %v1487
  %2111 = vmatprep.subr.bf16.mxu0 0
  %2112 = vmatpush1.bf16.msra.mxu0 %v1488
  %2113 = vmatprep.subr.bf16.mxu0 0
  %2114 = vmatpush1.bf16.msra.mxu0 %v1489
  %2115 = vmatprep.mubr.bf16.mxu0 %v533
  %2116 = vmatmul.mubr.bf16.gmra.mrb[0].mxu0 %v532
  %v2117 = vpop.f32.mrb[0].mxu0
  %v2118 = vadd.f32 %v2077, %v2117
  %v2119 = vpop.f32.mrb[0].mxu0
  %v2120 = vpop.f32.mrb[0].mxu0
  %v2121 = vadd.f32 %v2080, %v2120
  %v2122 = vpop.f32.mrb[0].mxu0
  %2123 = vdwg.mxu0
  %2124 = vmatprep.subr.bf16.mxu0 0
  %2125 = vmatpush1.bf16.msra.mxu0 %v1490
  %2126 = vmatprep.subr.bf16.mxu0 0
  %2127 = vmatpush1.bf16.msra.mxu0 %v1491
  %2128 = vmatprep.subr.bf16.mxu0 0
  %2129 = vmatpush1.bf16.msra.mxu0 %v1492
  %2130 = vmatprep.subr.bf16.mxu0 0
  %2131 = vmatpush1.bf16.msra.mxu0 %v1493
  %2132 = vmatprep.subr.bf16.mxu0 0
  %2133 = vmatpush1.bf16.msra.mxu0 %v1494
  %2134 = vmatprep.subr.bf16.mxu0 0
  %2135 = vmatpush1.bf16.msra.mxu0 %v1495
  %2136 = vmatprep.subr.bf16.mxu0 0
  %2137 = vmatpush1.bf16.msra.mxu0 %v1496
  %2138 = vmatprep.subr.bf16.mxu0 0
  %2139 = vmatpush1.bf16.msra.mxu0 %v1497
  %2140 = vmatprep.subr.bf16.mxu0 0
  %2141 = vmatpush1.bf16.msra.mxu0 %v1498
  %2142 = vmatprep.subr.bf16.mxu0 0
  %2143 = vmatpush1.bf16.msra.mxu0 %v1499
  %2144 = vmatprep.subr.bf16.mxu0 0
  %2145 = vmatpush1.bf16.msra.mxu0 %v1500
  %2146 = vmatprep.subr.bf16.mxu0 0
  %2147 = vmatpush1.bf16.msra.mxu0 %v1501
  %2148 = vmatprep.subr.bf16.mxu0 0
  %2149 = vmatpush1.bf16.msra.mxu0 %v1502
  %2150 = vmatprep.subr.bf16.mxu0 0
  %2151 = vmatpush1.bf16.msra.mxu0 %v1503
  %2152 = vmatprep.subr.bf16.mxu0 0
  %2153 = vmatpush1.bf16.msra.mxu0 %v1504
  %2154 = vmatprep.subr.bf16.mxu0 0
  %2155 = vmatpush1.bf16.msra.mxu0 %v1505
  %2156 = vmatprep.mubr.bf16.mxu0 %v535
  %2157 = vmatmul.mubr.bf16.gmra.mrb[0].mxu0 %v534
  %v2158 = vpop.f32.mrb[0].mxu0
  %v2159 = vadd.f32 %v2118, %v2158
  %v2160 = vpop.f32.mrb[0].mxu0
  %v2161 = vpop.f32.mrb[0].mxu0
  %v2162 = vadd.f32 %v2121, %v2161
  %v2163 = vpop.f32.mrb[0].mxu0
  %2164 = vdwg.mxu0
  %2165 = vmatprep.subr.bf16.mxu0 0
  %2166 = vmatpush1.bf16.msra.mxu0 %v1506
  %2167 = vmatprep.subr.bf16.mxu0 0
  %2168 = vmatpush1.bf16.msra.mxu0 %v1507
  %2169 = vmatprep.subr.bf16.mxu0 0
  %2170 = vmatpush1.bf16.msra.mxu0 %v1508
  %2171 = vmatprep.subr.bf16.mxu0 0
  %2172 = vmatpush1.bf16.msra.mxu0 %v1509
  %2173 = vmatprep.subr.bf16.mxu0 0
  %2174 = vmatpush1.bf16.msra.mxu0 %v1510
  %2175 = vmatprep.subr.bf16.mxu0 0
  %2176 = vmatpush1.bf16.msra.mxu0 %v1511
  %2177 = vmatprep.subr.bf16.mxu0 0
  %2178 = vmatpush1.bf16.msra.mxu0 %v1512
  %2179 = vmatprep.subr.bf16.mxu0 0
  %2180 = vmatpush1.bf16.msra.mxu0 %v1513
  %2181 = vmatprep.subr.bf16.mxu0 0
  %2182 = vmatpush1.bf16.msra.mxu0 %v1514
  %2183 = vmatprep.subr.bf16.mxu0 0
  %2184 = vmatpush1.bf16.msra.mxu0 %v1515
  %2185 = vmatprep.subr.bf16.mxu0 0
  %2186 = vmatpush1.bf16.msra.mxu0 %v1516
  %2187 = vmatprep.subr.bf16.mxu0 0
  %2188 = vmatpush1.bf16.msra.mxu0 %v1517
  %2189 = vmatprep.subr.bf16.mxu0 0
  %2190 = vmatpush1.bf16.msra.mxu0 %v1518
  %2191 = vmatprep.subr.bf16.mxu0 0
  %2192 = vmatpush1.bf16.msra.mxu0 %v1519
  %2193 = vmatprep.subr.bf16.mxu0 0
  %2194 = vmatpush1.bf16.msra.mxu0 %v1520
  %2195 = vmatprep.subr.bf16.mxu0 0
  %2196 = vmatpush1.bf16.msra.mxu0 %v1521
  %2197 = vmatprep.mubr.bf16.mxu0 %v537
  %2198 = vmatmul.mubr.bf16.gmra.mrb[0].mxu0 %v536
  %v2199 = vpop.f32.mrb[0].mxu0
  %v2200 = vadd.f32 %v2159, %v2199
  %v2201 = vpop.f32.mrb[0].mxu0
  %v2202 = vpop.f32.mrb[0].mxu0
  %v2203 = vadd.f32 %v2162, %v2202
  %v2204 = vpop.f32.mrb[0].mxu0
  %2205 = vdwg.mxu0
  %v2206 = vmax.f32 %v2200, 0.0
  %v2207 = vmax.f32 %v2203, 0.0
  %v2208 = vpack.c.bf16 %v2207, %v2206
  %v2209 = vld [vmem:[%s3] sm:$0xf]
  %v2210 = vld [vmem:[%s3 + $0x4] sm:$0xf]
  %v2211 = vld [vmem:[%s3 + $0x8] sm:$0xf]
  %v2212 = vld [vmem:[%s3 + $0xc] sm:$0xf]
  %v2213 = vld [vmem:[%s3 + $0x10] sm:$0xf]
  %v2214 = vld [vmem:[%s3 + $0x14] sm:$0xf]
  %v2215 = vld [vmem:[%s3 + $0x18] sm:$0xf]
  %v2216 = vld [vmem:[%s3 + $0x1c] sm:$0xf]
  %v2217 = vld [vmem:[%s4] sm:$0x1]
  %v2219 = vlaneseq
  %v2220 = vshrl.u32 %v2219, 7
  %v2221 = vsub.s32 0, %v2220
  %v2222 = vrot.slane %v2217, %v2221
  %v2232 = vunpack.c.l.b16 %v2209
  %v2233 = vunpack.c.l.b16 %v2210
  %v2234 = vunpack.c.l.b16 %v2211
  %v2235 = vunpack.c.l.b16 %v2212
  %v2236 = vunpack.c.l.b16 %v2213
  %v2237 = vunpack.c.l.b16 %v2214
  %v2238 = vunpack.c.l.b16 %v2215
  %v2239 = vunpack.c.l.b16 %v2216
  %v2240 = vpack.c.b16 %v2233, %v2232
  %v2241 = vpack.c.b16 %v2235, %v2234
  %v2242 = vpack.c.b16 %v2237, %v2236
  %v2243 = vpack.c.b16 %v2239, %v2238
  %vm2248 = vcmask 523264
  %v2250 = vsel %vm2248, %v2208, 0
  %2252 = vmatprep.subr.bf16.mxu0 0
  %2253 = vmatpush1.bf16.msra.mxu0 %v2240
  %2254 = vmatprep.subr.bf16.mxu0 0
  %2255 = vmatpush1.bf16.msra.mxu0 %v2241
  %2256 = vmatprep.subr.bf16.mxu0 0
  %2257 = vmatpush1.bf16.msra.mxu0 %v2242
  %2258 = vmatprep.subr.bf16.mxu0 0
  %2259 = vmatpush1.bf16.msra.mxu0 %v2243
  %2260 = vmatprep.subr.bf16.mxu0 0
  %2261 = vmatpush1.bf16.msra.mxu0 0
  %2262 = vmatprep.subr.bf16.mxu0 0
  %2263 = vmatpush1.bf16.msra.mxu0 0
  %2264 = vmatprep.subr.bf16.mxu0 0
  %2265 = vmatpush1.bf16.msra.mxu0 0
  %2266 = vmatprep.subr.bf16.mxu0 0
  %2267 = vmatpush1.bf16.msra.mxu0 0
  %2268 = vmatprep.subr.bf16.mxu0 0
  %2269 = vmatpush1.bf16.msra.mxu0 0
  %2270 = vmatprep.subr.bf16.mxu0 0
  %2271 = vmatpush1.bf16.msra.mxu0 0
  %2272 = vmatprep.subr.bf16.mxu0 0
  %2273 = vmatpush1.bf16.msra.mxu0 0
  %2274 = vmatprep.subr.bf16.mxu0 0
  %2275 = vmatpush1.bf16.msra.mxu0 0
  %2276 = vmatprep.subr.bf16.mxu0 0
  %2277 = vmatpush1.bf16.msra.mxu0 0
  %2278 = vmatprep.subr.bf16.mxu0 0
  %2279 = vmatpush1.bf16.msra.mxu0 0
  %2280 = vmatprep.subr.bf16.mxu0 0
  %2281 = vmatpush1.bf16.msra.mxu0 0
  %2282 = vmatprep.subr.bf16.mxu0 0
  %2283 = vmatpush1.bf16.msra.mxu0 0
  %2284 = vmatprep.mubr.bf16.mxu0 0
  %2285 = vmatmul.mubr.bf16.gmra.mrb[0].mxu0 %v2250
  %v2286 = vpop.f32.mrb[0].mxu0
  %v2287 = vadd.f32 %v2222, %v2286
  %v2288 = vpop.f32.mrb[0].mxu0
  %v2289 = vpop.f32.mrb[0].mxu0
  %v2290 = vadd.f32 %v2222, %v2289
  %v2291 = vpop.f32.mrb[0].mxu0
  %2292 = vdwg.mxu0
  %v2293 = vmax.f32 %v2287, 0.0
  %v2294 = vmax.f32 %v2290, 0.0
  %v2295 = vpack.c.bf16 %v2294, %v2293
  %v2296 = vld [vmem:[%s5] sm:$0xf]
  %v2297 = vld [vmem:[%s5 + $0x4] sm:$0xf]
  %v2298 = vld [vmem:[%s5 + $0x8] sm:$0xf]
  %v2299 = vld [vmem:[%s5 + $0xc] sm:$0xf]
  %v2300 = vld [vmem:[%s6] sm:$0x1]
  %v2302 = vlaneseq
  %v2303 = vshrl.u32 %v2302, 7
  %v2304 = vsub.s32 0, %v2303
  %v2305 = vrot.slane %v2300, %v2304
  %v2311 = vunpack.c.l.b16 %v2296
  %v2312 = vunpack.c.l.b16 %v2297
  %v2313 = vunpack.c.l.b16 %v2298
  %v2314 = vunpack.c.l.b16 %v2299
  %v2315 = vpack.c.b16 %v2312, %v2311
  %v2316 = vpack.c.b16 %v2314, %v2313
  %vm2319 = vcmask 261120
  %v2321 = vsel %vm2319, %v2295, 0
  %2323 = vmatprep.subr.bf16.mxu0 0
  %2324 = vmatpush1.bf16.msra.mxu0 %v2315
  %2325 = vmatprep.subr.bf16.mxu0 0
  %2326 = vmatpush1.bf16.msra.mxu0 %v2316
  %2327 = vmatprep.subr.bf16.mxu0 0
  %2328 = vmatpush1.bf16.msra.mxu0 0
  %2329 = vmatprep.subr.bf16.mxu0 0
  %2330 = vmatpush1.bf16.msra.mxu0 0
  %2331 = vmatprep.subr.bf16.mxu0 0
  %2332 = vmatpush1.bf16.msra.mxu0 0
  %2333 = vmatprep.subr.bf16.mxu0 0
  %2334 = vmatpush1.bf16.msra.mxu0 0
  %2335 = vmatprep.subr.bf16.mxu0 0
  %2336 = vmatpush1.bf16.msra.mxu0 0
  %2337 = vmatprep.subr.bf16.mxu0 0
  %2338 = vmatpush1.bf16.msra.mxu0 0
  %2339 = vmatprep.subr.bf16.mxu0 0
  %2340 = vmatpush1.bf16.msra.mxu0 0
  %2341 = vmatprep.subr.bf16.mxu0 0
  %2342 = vmatpush1.bf16.msra.mxu0 0
  %2343 = vmatprep.subr.bf16.mxu0 0
  %2344 = vmatpush1.bf16.msra.mxu0 0
  %2345 = vmatprep.subr.bf16.mxu0 0
  %2346 = vmatpush1.bf16.msra.mxu0 0
  %2347 = vmatprep.subr.bf16.mxu0 0
  %2348 = vmatpush1.bf16.msra.mxu0 0
  %2349 = vmatprep.subr.bf16.mxu0 0
  %2350 = vmatpush1.bf16.msra.mxu0 0
  %2351 = vmatprep.subr.bf16.mxu0 0
  %2352 = vmatpush1.bf16.msra.mxu0 0
  %2353 = vmatprep.subr.bf16.mxu0 0
  %2354 = vmatpush1.bf16.msra.mxu0 0
  %2355 = vmatprep.mubr.bf16.mxu0 0
  %2356 = vmatmul.mubr.bf16.gmra.mrb[0].mxu0 %v2321
  %v2357 = vpop.f32.mrb[0].mxu0
  %v2358 = vadd.f32 %v2305, %v2357
  %v2359 = vpop.f32.mrb[0].mxu0
  %v2360 = vpop.f32.mrb[0].mxu0
  %v2361 = vadd.f32 %v2305, %v2360
  %v2362 = vpop.f32.mrb[0].mxu0
  %2363 = vdwg.mxu0
  %vm2364 = vcmask 80896
  %2365 = vst.msk [vmem:[%s7] sm:$0xff] %vm2364, %v2358
  %2366 = vst.msk [vmem:[%s7 + $0x8] sm:$0xff] %vm2364, %v2361
  // Predicated region
  $region30: #{mlp_forward.1} parent=0 // pred_check
    _
  $region31: #{mlp_forward.1} parent=0 // pred_check_branch
    %2368 = sbr.rel (0) target = $region33
  $region32: #{mlp_forward.1} parent=0 // pred_region
    _
  $region33: #{mlp_forward.1} parent=0 // pred_fallthru
    _
  // Predicated region
  $region34: #{mlp_forward.1} parent=0 // pred_check
    _
  $region35: #{mlp_forward.1} parent=0 // pred_check_branch
    %2370 = sbr.rel (0) target = $region37
  $region36: #{mlp_forward.1} parent=0 // pred_region
    _
  $region37: #{mlp_forward.1} parent=0 // pred_fallthru
    _

</llo_original>
